<compile_context>
chip_gen: v5e
topology: v5e:2x2
jax: 0.10.0
libtpu: 0.0.40
codegen_flags: <defaults>
</compile_context>

<pallas_src>
import functools

import numpy as np
import jax
import jax.numpy as jnp
from jax.experimental import pallas as pl
from jax.experimental.pallas import tpu as pltpu


# ----------------------------- fused kernel ----------------------------------

def _make_kernel(B):
    S1 = B * 144            # lanes per pooled-conv1 (b, 12, 12) slab
    W_H1 = S1 + 96          # conv2 input slab width (lanes >= S1 are don't-care)
    W_Y2 = S1 + 16          # conv2 output slab width (12x12 lane grid + pool margin)
    W_Y1 = 3 * S1 + W_H1    # conv1 output slab width (= 4*S1 + 96)

    def kernel(cols1_ref, w1_ref, b1_ref, w2_ref, b2_ref, s2_ref,
               wfc1_ref, bfc1_ref, wfc2_ref, bfc2_ref, out_ref):
        f32 = jnp.float32

        # conv1 as one lane-dense GEMM on the MXU: (16, 32) @ (32, W_Y1).
        y1 = jnp.dot(w1_ref[...], cols1_ref[...],
                     preferred_element_type=f32) + b1_ref[...]

        # 2x2 max-pool + ReLU.  The wrapper ordered conv1's lanes as
        # (dj, di, b, ii, jj), so the four window elements are four contiguous
        # lane slabs -> plain element-wise max over full vregs.
        h1 = jnp.maximum(
            jnp.maximum(y1[:, 0:W_H1], y1[:, S1:S1 + W_H1]),
            jnp.maximum(y1[:, 2 * S1:2 * S1 + W_H1], y1[:, 3 * S1:3 * S1 + W_H1]))
        h1 = jnp.maximum(h1, 0.0)                      # (16, W_H1)

        # conv2 with in-kernel im2col: each (ki, kj) tap of the 12x12 pooled map
        # is a constant lane shift, so the (Cin*K*K, spatial) patch matrix is 25
        # static slices stacked on the sublane axis + a single MXU GEMM.
        taps = [h1[:, (ki * 12 + kj):(ki * 12 + kj) + W_Y2]
                for ki in range(5) for kj in range(5)]
        cols2 = jnp.concatenate(taps, axis=0)          # (400, W_Y2)
        y2 = jnp.dot(w2_ref[...], cols2,
                     preferred_element_type=f32) + b2_ref[...]   # (24, W_Y2)
        # TODO(synk): nn.Dropout2d / F.dropout are identity in eval mode; the
        # training-mode RNG masking is not implemented here.

        # 2x2 max-pool + ReLU on the 12x12 lane grid (tap shifts 0, 1, 12, 13).
        z = jnp.maximum(
            jnp.maximum(y2[:, 0:S1], y2[:, 1:S1 + 1]),
            jnp.maximum(y2[:, 12:S1 + 12], y2[:, 13:S1 + 13]))
        z = jnp.maximum(z, 0.0)                        # (24, S1)

        # Compact the stride-2 pooled lanes and reorder them to
        # (spatial-position-major, batch) with one 0/1 selection GEMM.
        h2 = jnp.dot(z, s2_ref[...], preferred_element_type=f32)   # (24, 16*B)

        # Flatten: torch's .view(-1, 320) NCHW order is folded into wfc1's
        # columns at trace time; here we just stack the 16 spatial positions on
        # the sublane axis.
        xflat = jnp.concatenate([h2[:, B * s:B * s + B] for s in range(16)],
                                axis=0)                # (384, B)

        # fc1 -> ReLU -> fc2 -> log_softmax (classes live on the sublane axis).
        hid = jnp.dot(wfc1_ref[...], xflat,
                      preferred_element_type=f32) + bfc1_ref[...]  # (50, B)
        hid = jnp.maximum(hid, 0.0)
        logits = jnp.dot(wfc2_ref[...], hid,
                         preferred_element_type=f32) + bfc2_ref[...]  # (10, B)
        m = jnp.max(logits, axis=0, keepdims=True)
        s = logits - m
        lse = jnp.log(jnp.sum(jnp.exp(s), axis=0, keepdims=True))
        out_ref[...] = s - lse                         # log_softmax over classes

    return kernel, W_Y1


# ------------------------- trace-time weight packing --------------------------

def _pack_params(params):
    """Repack torch-layout weights into the kernel's lane-dense, padded layouts."""
    # conv1: (10,1,5,5) -> (16, 32); K (ki*5+kj) padded 25->32, Cout 10->16.
    w1 = params["w_conv1"].reshape(10, 25)
    w1 = jnp.pad(w1, ((0, 6), (0, 7)))
    b1 = jnp.pad(params["b_conv1"], (0, 6)).reshape(16, 1)
    # conv2: (20,10,5,5) -> (24, 400); columns ordered ((ki*5+kj)*16 + ci).
    w2 = jnp.transpose(params["w_conv2"], (0, 2, 3, 1))        # (20, 5, 5, 10)
    w2 = jnp.pad(w2, ((0, 4), (0, 0), (0, 0), (0, 6)))         # (24, 5, 5, 16)
    w2 = w2.reshape(24, 400)
    b2 = jnp.pad(params["b_conv2"], (0, 4)).reshape(24, 1)
    # fc1: permute columns from torch's flatten order (c*16 + s) to the kernel's
    # (s*24 + c) order (channels padded 20->24); done once at trace time.
    wfc1 = params["w_fc1"].reshape(50, 20, 16)                 # (n, c, s)
    wfc1 = jnp.transpose(wfc1, (0, 2, 1))                      # (n, s, c)
    wfc1 = jnp.pad(wfc1, ((0, 0), (0, 0), (0, 4))).reshape(50, 16 * 24)
    bfc1 = params["b_fc1"].reshape(50, 1)
    wfc2 = params["w_fc2"]                                     # (10, 50)
    bfc2 = params["b_fc2"].reshape(10, 1)
    return dict(w1=w1, b1=b1, w2=w2, b2=b2,
                wfc1=wfc1, bfc1=bfc1, wfc2=wfc2, bfc2=bfc2)


def _pool2_select(B):
    """0/1 matrix compacting the stride-2 pool2 lanes into (s-major, batch) order."""
    s2 = np.zeros((B * 144, 16 * B), np.float32)
    for b in range(B):
        for ii in range(4):
            for jj in range(4):
                s2[b * 144 + (2 * ii) * 12 + 2 * jj, (ii * 4 + jj) * B + b] = 1.0
    return jnp.asarray(s2)


def _conv1_patches(x, w_y1):
    """x: (B,1,28,28) -> (32, w_y1) conv1 patch matrix; lanes ordered
    (dj, di, b, ii, jj) so the in-kernel 2x2 pool is 4 contiguous slabs."""
    B = x.shape[0]
    xs = x[:, 0]                                               # (B, 28, 28)
    rows = []
    for ki in range(5):
        for kj in range(5):
            blocks = [xs[:, di + ki:di + ki + 24:2, dj + kj:dj + kj + 24:2]
                      for dj in (0, 1) for di in (0, 1)]       # 4 x (B, 12, 12)
            rows.append(jnp.stack(blocks, axis=0).reshape(-1)) # (4*B*144,)
    cols1 = jnp.stack(rows, axis=0)                            # (25, 4*B*144)
    return jnp.pad(cols1, ((0, 7), (0, w_y1 - 4 * B * 144)))


# ------------------------------ fused forward ---------------------------------

@jax.jit
def net_forward(x, packed, s2):
    B = x.shape[0]
    kernel, w_y1 = _make_kernel(B)
    cols1 = _conv1_patches(x, w_y1)

    def full(shape):
        return pl.BlockSpec(shape, lambda i, _s=shape: (0,) * len(_s))

    args = (cols1, packed["w1"], packed["b1"], packed["w2"], packed["b2"], s2,
            packed["wfc1"], packed["bfc1"], packed["wfc2"], packed["bfc2"])
    out = pl.pallas_call(
        kernel,
        grid=(1,),
        in_specs=[full(a.shape) for a in args],
        out_specs=full((10, B)),
        out_shape=jax.ShapeDtypeStruct((10, B), jnp.float32),
        compiler_params=pltpu.CompilerParams(dimension_semantics=("arbitrary",)),
    )(*args)
    return out.T                                               # (B, 10)


# --------------------------- pure-JAX reference -------------------------------

def ref_forward(x, params):
    def conv(x, w, b):
        y = jax.lax.conv_general_dilated(
            x, w, window_strides=(1, 1), padding="VALID",
            dimension_numbers=("NCHW", "OIHW", "NCHW"))
        return y + b.reshape(1, -1, 1, 1)

    def pool(y):
        B, C, H, W = y.shape
        return y.reshape(B, C, H // 2, 2, W // 2, 2).max(axis=(3, 5))

    y = jnp.maximum(pool(conv(x, params["w_conv1"], params["b_conv1"])), 0.0)
    y = jnp.maximum(pool(conv(y, params["w_conv2"], params["b_conv2"])), 0.0)
    y = y.reshape(y.shape[0], 320)
    h = jnp.maximum(y @ params["w_fc1"].T + params["b_fc1"], 0.0)
    logits = h @ params["w_fc2"].T + params["b_fc2"]
    return jax.nn.log_softmax(logits, axis=-1)


# ------------------------------- main -----------------------------------------

if __name__ == "__main__":
    key = jax.random.PRNGKey(0)
    kx, k1, k2, k3, k4, k5, k6, k7, k8 = jax.random.split(key, 9)

    # deterministic synthetic parameters (shapes from the module's __init__)
    params = {
        "w_conv1": 0.1 * jax.random.normal(k1, (10, 1, 5, 5), jnp.float32),
        "b_conv1": 0.1 * jax.random.normal(k2, (10,), jnp.float32),
        "w_conv2": 0.1 * jax.random.normal(k3, (20, 10, 5, 5), jnp.float32),
        "b_conv2": 0.1 * jax.random.normal(k4, (20,), jnp.float32),
        "w_fc1":   0.1 * jax.random.normal(k5, (50, 320), jnp.float32),
        "b_fc1":   0.1 * jax.random.normal(k6, (50,), jnp.float32),
        "w_fc2":   0.1 * jax.random.normal(k7, (10, 50), jnp.float32),
        "b_fc2":   0.1 * jax.random.normal(k8, (10,), jnp.float32),
    }

    # input must be 28x28 (the flatten to 320 = 20*4*4 implies MNIST geometry)
    x = jax.random.normal(kx, (2, 1, 28, 28), jnp.float32)

    packed = _pack_params(params)     # one-time trace-time weight repacking
    s2 = _pool2_select(x.shape[0])

    out = net_forward(x, packed, s2)
    out = jax.block_until_ready(out)
    assert out.shape == (2, 10), out.shape

    ref = jax.block_until_ready(ref_forward(x, params))
    assert jnp.allclose(out, ref, atol=2e-3, rtol=2e-3), (
        float(jnp.max(jnp.abs(out - ref))))

    print("KERNEL_OK")
</pallas_src>

<mosaic_0001>
module attributes {stable_mosaic.version = 11 : i64} {
  func.func @kernel(%arg0: i32, %arg1: memref<32x1248xf32, #tpu.memory_space<vmem>>, %arg2: memref<16x32xf32, #tpu.memory_space<vmem>>, %arg3: memref<16x1xf32, #tpu.memory_space<vmem>>, %arg4: memref<24x400xf32, #tpu.memory_space<vmem>>, %arg5: memref<24x1xf32, #tpu.memory_space<vmem>>, %arg6: memref<288x32xf32, #tpu.memory_space<vmem>>, %arg7: memref<50x384xf32, #tpu.memory_space<vmem>>, %arg8: memref<50x1xf32, #tpu.memory_space<vmem>>, %arg9: memref<10x50xf32, #tpu.memory_space<vmem>>, %arg10: memref<10x1xf32, #tpu.memory_space<vmem>>, %arg11: memref<10x2xf32, #tpu.memory_space<vmem>>) attributes {dimension_semantics = [#tpu.dimension_semantics<arbitrary>], iteration_bounds = array<i64: 1>, scalar_prefetch = 0 : i64, scratch_operands = 0 : i64, tpu.core_type = #tpu.core_type<tc>, window_params = [{pipeline_mode = #tpu.pipeline_mode<synchronous>, transform_indices = @transform_0, window_bounds = array<i64: 32, 1248>}, {pipeline_mode = #tpu.pipeline_mode<synchronous>, transform_indices = @transform_1, window_bounds = array<i64: 16, 32>}, {pipeline_mode = #tpu.pipeline_mode<synchronous>, transform_indices = @transform_2, window_bounds = array<i64: 16, 1>}, {pipeline_mode = #tpu.pipeline_mode<synchronous>, transform_indices = @transform_3, window_bounds = array<i64: 24, 400>}, {pipeline_mode = #tpu.pipeline_mode<synchronous>, transform_indices = @transform_4, window_bounds = array<i64: 24, 1>}, {pipeline_mode = #tpu.pipeline_mode<synchronous>, transform_indices = @transform_5, window_bounds = array<i64: 288, 32>}, {pipeline_mode = #tpu.pipeline_mode<synchronous>, transform_indices = @transform_6, window_bounds = array<i64: 50, 384>}, {pipeline_mode = #tpu.pipeline_mode<synchronous>, transform_indices = @transform_7, window_bounds = array<i64: 50, 1>}, {pipeline_mode = #tpu.pipeline_mode<synchronous>, transform_indices = @transform_8, window_bounds = array<i64: 10, 50>}, {pipeline_mode = #tpu.pipeline_mode<synchronous>, transform_indices = @transform_9, window_bounds = array<i64: 10, 1>}, {pipeline_mode = #tpu.pipeline_mode<synchronous>, transform_indices = @transform_10, window_bounds = array<i64: 10, 2>}]} {
    %c0 = arith.constant 0 : index
    %c0_0 = arith.constant 0 : index
    %0 = vector.load %arg2[%c0, %c0_0] : memref<16x32xf32, #tpu.memory_space<vmem>>, vector<16x32xf32>
    %c0_1 = arith.constant 0 : index
    %c0_2 = arith.constant 0 : index
    %1 = vector.load %arg1[%c0_1, %c0_2] : memref<32x1248xf32, #tpu.memory_space<vmem>>, vector<32x1248xf32>
    %cst = arith.constant dense<0.000000e+00> : vector<16x1248xf32>
    %2 = tpu.matmul %0, %1, %cst {dimension_numbers = #tpu.dot_dimension_numbers<[1], [0], [0], [1], [0, 0, 1, 1], [], []>} : vector<16x32xf32>, vector<32x1248xf32>, vector<16x1248xf32> -> vector<16x1248xf32>
    %c0_3 = arith.constant 0 : index
    %c0_4 = arith.constant 0 : index
    %3 = vector.load %arg3[%c0_3, %c0_4] : memref<16x1xf32, #tpu.memory_space<vmem>>, vector<16x1xf32>
    %4 = vector.broadcast %3 : vector<16x1xf32> to vector<16x1248xf32>
    %5 = arith.addf %2, %4 : vector<16x1248xf32>
    %6 = vector.extract_strided_slice %5 {offsets = [0, 0], sizes = [16, 384], strides = [1, 1]} : vector<16x1248xf32> to vector<16x384xf32>
    %7 = vector.extract_strided_slice %5 {offsets = [0, 288], sizes = [16, 384], strides = [1, 1]} : vector<16x1248xf32> to vector<16x384xf32>
    %8 = arith.maximumf %6, %7 : vector<16x384xf32>
    %9 = vector.extract_strided_slice %5 {offsets = [0, 576], sizes = [16, 384], strides = [1, 1]} : vector<16x1248xf32> to vector<16x384xf32>
    %10 = vector.extract_strided_slice %5 {offsets = [0, 864], sizes = [16, 384], strides = [1, 1]} : vector<16x1248xf32> to vector<16x384xf32>
    %11 = arith.maximumf %9, %10 : vector<16x384xf32>
    %12 = arith.maximumf %8, %11 : vector<16x384xf32>
    %cst_5 = arith.constant 0.000000e+00 : f32
    %13 = vector.broadcast %cst_5 : f32 to vector<16x384xf32>
    %14 = arith.maximumf %12, %13 : vector<16x384xf32>
    %15 = vector.extract_strided_slice %14 {offsets = [0, 0], sizes = [16, 304], strides = [1, 1]} : vector<16x384xf32> to vector<16x304xf32>
    %16 = vector.extract_strided_slice %14 {offsets = [0, 1], sizes = [16, 304], strides = [1, 1]} : vector<16x384xf32> to vector<16x304xf32>
    %17 = vector.extract_strided_slice %14 {offsets = [0, 2], sizes = [16, 304], strides = [1, 1]} : vector<16x384xf32> to vector<16x304xf32>
    %18 = vector.extract_strided_slice %14 {offsets = [0, 3], sizes = [16, 304], strides = [1, 1]} : vector<16x384xf32> to vector<16x304xf32>
    %19 = vector.extract_strided_slice %14 {offsets = [0, 4], sizes = [16, 304], strides = [1, 1]} : vector<16x384xf32> to vector<16x304xf32>
    %20 = vector.extract_strided_slice %14 {offsets = [0, 12], sizes = [16, 304], strides = [1, 1]} : vector<16x384xf32> to vector<16x304xf32>
    %21 = vector.extract_strided_slice %14 {offsets = [0, 13], sizes = [16, 304], strides = [1, 1]} : vector<16x384xf32> to vector<16x304xf32>
    %22 = vector.extract_strided_slice %14 {offsets = [0, 14], sizes = [16, 304], strides = [1, 1]} : vector<16x384xf32> to vector<16x304xf32>
    %23 = vector.extract_strided_slice %14 {offsets = [0, 15], sizes = [16, 304], strides = [1, 1]} : vector<16x384xf32> to vector<16x304xf32>
    %24 = vector.extract_strided_slice %14 {offsets = [0, 16], sizes = [16, 304], strides = [1, 1]} : vector<16x384xf32> to vector<16x304xf32>
    %25 = vector.extract_strided_slice %14 {offsets = [0, 24], sizes = [16, 304], strides = [1, 1]} : vector<16x384xf32> to vector<16x304xf32>
    %26 = vector.extract_strided_slice %14 {offsets = [0, 25], sizes = [16, 304], strides = [1, 1]} : vector<16x384xf32> to vector<16x304xf32>
    %27 = vector.extract_strided_slice %14 {offsets = [0, 26], sizes = [16, 304], strides = [1, 1]} : vector<16x384xf32> to vector<16x304xf32>
    %28 = vector.extract_strided_slice %14 {offsets = [0, 27], sizes = [16, 304], strides = [1, 1]} : vector<16x384xf32> to vector<16x304xf32>
    %29 = vector.extract_strided_slice %14 {offsets = [0, 28], sizes = [16, 304], strides = [1, 1]} : vector<16x384xf32> to vector<16x304xf32>
    %30 = vector.extract_strided_slice %14 {offsets = [0, 36], sizes = [16, 304], strides = [1, 1]} : vector<16x384xf32> to vector<16x304xf32>
    %31 = vector.extract_strided_slice %14 {offsets = [0, 37], sizes = [16, 304], strides = [1, 1]} : vector<16x384xf32> to vector<16x304xf32>
    %32 = vector.extract_strided_slice %14 {offsets = [0, 38], sizes = [16, 304], strides = [1, 1]} : vector<16x384xf32> to vector<16x304xf32>
    %33 = vector.extract_strided_slice %14 {offsets = [0, 39], sizes = [16, 304], strides = [1, 1]} : vector<16x384xf32> to vector<16x304xf32>
    %34 = vector.extract_strided_slice %14 {offsets = [0, 40], sizes = [16, 304], strides = [1, 1]} : vector<16x384xf32> to vector<16x304xf32>
    %35 = vector.extract_strided_slice %14 {offsets = [0, 48], sizes = [16, 304], strides = [1, 1]} : vector<16x384xf32> to vector<16x304xf32>
    %36 = vector.extract_strided_slice %14 {offsets = [0, 49], sizes = [16, 304], strides = [1, 1]} : vector<16x384xf32> to vector<16x304xf32>
    %37 = vector.extract_strided_slice %14 {offsets = [0, 50], sizes = [16, 304], strides = [1, 1]} : vector<16x384xf32> to vector<16x304xf32>
    %38 = vector.extract_strided_slice %14 {offsets = [0, 51], sizes = [16, 304], strides = [1, 1]} : vector<16x384xf32> to vector<16x304xf32>
    %39 = vector.extract_strided_slice %14 {offsets = [0, 52], sizes = [16, 304], strides = [1, 1]} : vector<16x384xf32> to vector<16x304xf32>
    %40 = tpu.concatenate %15, %16, %17, %18, %19, %20, %21, %22, %23, %24, %25, %26, %27, %28, %29, %30 in 0 : vector<16x304xf32>, vector<16x304xf32>, vector<16x304xf32>, vector<16x304xf32>, vector<16x304xf32>, vector<16x304xf32>, vector<16x304xf32>, vector<16x304xf32>, vector<16x304xf32>, vector<16x304xf32>, vector<16x304xf32>, vector<16x304xf32>, vector<16x304xf32>, vector<16x304xf32>, vector<16x304xf32>, vector<16x304xf32> -> vector<256x304xf32>
    %41 = tpu.concatenate %31, %32, %33, %34, %35, %36, %37, %38, %39 in 0 : vector<16x304xf32>, vector<16x304xf32>, vector<16x304xf32>, vector<16x304xf32>, vector<16x304xf32>, vector<16x304xf32>, vector<16x304xf32>, vector<16x304xf32>, vector<16x304xf32> -> vector<144x304xf32>
    %42 = tpu.concatenate %40, %41 in 0 : vector<256x304xf32>, vector<144x304xf32> -> vector<400x304xf32>
    %c0_6 = arith.constant 0 : index
    %c0_7 = arith.constant 0 : index
    %43 = vector.load %arg4[%c0_6, %c0_7] : memref<24x400xf32, #tpu.memory_space<vmem>>, vector<24x400xf32>
    %cst_8 = arith.constant dense<0.000000e+00> : vector<24x304xf32>
    %44 = tpu.matmul %43, %42, %cst_8 {dimension_numbers = #tpu.dot_dimension_numbers<[1], [0], [0], [1], [0, 0, 1, 1], [], []>} : vector<24x400xf32>, vector<400x304xf32>, vector<24x304xf32> -> vector<24x304xf32>
    %c0_9 = arith.constant 0 : index
    %c0_10 = arith.constant 0 : index
    %45 = vector.load %arg5[%c0_9, %c0_10] : memref<24x1xf32, #tpu.memory_space<vmem>>, vector<24x1xf32>
    %46 = vector.broadcast %45 : vector<24x1xf32> to vector<24x304xf32>
    %47 = arith.addf %44, %46 : vector<24x304xf32>
    %48 = vector.extract_strided_slice %47 {offsets = [0, 0], sizes = [24, 288], strides = [1, 1]} : vector<24x304xf32> to vector<24x288xf32>
    %49 = vector.extract_strided_slice %47 {offsets = [0, 1], sizes = [24, 288], strides = [1, 1]} : vector<24x304xf32> to vector<24x288xf32>
    %50 = arith.maximumf %48, %49 : vector<24x288xf32>
    %51 = vector.extract_strided_slice %47 {offsets = [0, 12], sizes = [24, 288], strides = [1, 1]} : vector<24x304xf32> to vector<24x288xf32>
    %52 = vector.extract_strided_slice %47 {offsets = [0, 13], sizes = [24, 288], strides = [1, 1]} : vector<24x304xf32> to vector<24x288xf32>
    %53 = arith.maximumf %51, %52 : vector<24x288xf32>
    %54 = arith.maximumf %50, %53 : vector<24x288xf32>
    %cst_11 = arith.constant 0.000000e+00 : f32
    %55 = vector.broadcast %cst_11 : f32 to vector<24x288xf32>
    %56 = arith.maximumf %54, %55 : vector<24x288xf32>
    %c0_12 = arith.constant 0 : index
    %c0_13 = arith.constant 0 : index
    %57 = vector.load %arg6[%c0_12, %c0_13] : memref<288x32xf32, #tpu.memory_space<vmem>>, vector<288x32xf32>
    %cst_14 = arith.constant dense<0.000000e+00> : vector<24x32xf32>
    %58 = tpu.matmul %56, %57, %cst_14 {dimension_numbers = #tpu.dot_dimension_numbers<[1], [0], [0], [1], [0, 0, 1, 1], [], []>} : vector<24x288xf32>, vector<288x32xf32>, vector<24x32xf32> -> vector<24x32xf32>
    %59 = vector.extract_strided_slice %58 {offsets = [0, 0], sizes = [24, 2], strides = [1, 1]} : vector<24x32xf32> to vector<24x2xf32>
    %60 = vector.extract_strided_slice %58 {offsets = [0, 2], sizes = [24, 2], strides = [1, 1]} : vector<24x32xf32> to vector<24x2xf32>
    %61 = vector.extract_strided_slice %58 {offsets = [0, 4], sizes = [24, 2], strides = [1, 1]} : vector<24x32xf32> to vector<24x2xf32>
    %62 = vector.extract_strided_slice %58 {offsets = [0, 6], sizes = [24, 2], strides = [1, 1]} : vector<24x32xf32> to vector<24x2xf32>
    %63 = vector.extract_strided_slice %58 {offsets = [0, 8], sizes = [24, 2], strides = [1, 1]} : vector<24x32xf32> to vector<24x2xf32>
    %64 = vector.extract_strided_slice %58 {offsets = [0, 10], sizes = [24, 2], strides = [1, 1]} : vector<24x32xf32> to vector<24x2xf32>
    %65 = vector.extract_strided_slice %58 {offsets = [0, 12], sizes = [24, 2], strides = [1, 1]} : vector<24x32xf32> to vector<24x2xf32>
    %66 = vector.extract_strided_slice %58 {offsets = [0, 14], sizes = [24, 2], strides = [1, 1]} : vector<24x32xf32> to vector<24x2xf32>
    %67 = vector.extract_strided_slice %58 {offsets = [0, 16], sizes = [24, 2], strides = [1, 1]} : vector<24x32xf32> to vector<24x2xf32>
    %68 = vector.extract_strided_slice %58 {offsets = [0, 18], sizes = [24, 2], strides = [1, 1]} : vector<24x32xf32> to vector<24x2xf32>
    %69 = vector.extract_strided_slice %58 {offsets = [0, 20], sizes = [24, 2], strides = [1, 1]} : vector<24x32xf32> to vector<24x2xf32>
    %70 = vector.extract_strided_slice %58 {offsets = [0, 22], sizes = [24, 2], strides = [1, 1]} : vector<24x32xf32> to vector<24x2xf32>
    %71 = vector.extract_strided_slice %58 {offsets = [0, 24], sizes = [24, 2], strides = [1, 1]} : vector<24x32xf32> to vector<24x2xf32>
    %72 = vector.extract_strided_slice %58 {offsets = [0, 26], sizes = [24, 2], strides = [1, 1]} : vector<24x32xf32> to vector<24x2xf32>
    %73 = vector.extract_strided_slice %58 {offsets = [0, 28], sizes = [24, 2], strides = [1, 1]} : vector<24x32xf32> to vector<24x2xf32>
    %74 = vector.extract_strided_slice %58 {offsets = [0, 30], sizes = [24, 2], strides = [1, 1]} : vector<24x32xf32> to vector<24x2xf32>
    %75 = tpu.concatenate %59, %60, %61, %62, %63, %64, %65, %66, %67, %68, %69, %70, %71, %72, %73, %74 in 0 : vector<24x2xf32>, vector<24x2xf32>, vector<24x2xf32>, vector<24x2xf32>, vector<24x2xf32>, vector<24x2xf32>, vector<24x2xf32>, vector<24x2xf32>, vector<24x2xf32>, vector<24x2xf32>, vector<24x2xf32>, vector<24x2xf32>, vector<24x2xf32>, vector<24x2xf32>, vector<24x2xf32>, vector<24x2xf32> -> vector<384x2xf32>
    %c0_15 = arith.constant 0 : index
    %c0_16 = arith.constant 0 : index
    %76 = vector.load %arg7[%c0_15, %c0_16] : memref<50x384xf32, #tpu.memory_space<vmem>>, vector<50x384xf32>
    %cst_17 = arith.constant dense<0.000000e+00> : vector<50x2xf32>
    %77 = tpu.matmul %76, %75, %cst_17 {dimension_numbers = #tpu.dot_dimension_numbers<[1], [0], [0], [1], [0, 0, 1, 1], [], []>} : vector<50x384xf32>, vector<384x2xf32>, vector<50x2xf32> -> vector<50x2xf32>
    %c0_18 = arith.constant 0 : index
    %c0_19 = arith.constant 0 : index
    %78 = vector.load %arg8[%c0_18, %c0_19] : memref<50x1xf32, #tpu.memory_space<vmem>>, vector<50x1xf32>
    %79 = vector.broadcast %78 : vector<50x1xf32> to vector<50x2xf32>
    %80 = arith.addf %77, %79 : vector<50x2xf32>
    %cst_20 = arith.constant 0.000000e+00 : f32
    %81 = vector.broadcast %cst_20 : f32 to vector<50x2xf32>
    %82 = arith.maximumf %80, %81 : vector<50x2xf32>
    %c0_21 = arith.constant 0 : index
    %c0_22 = arith.constant 0 : index
    %83 = vector.load %arg9[%c0_21, %c0_22] : memref<10x50xf32, #tpu.memory_space<vmem>>, vector<10x50xf32>
    %cst_23 = arith.constant dense<0.000000e+00> : vector<10x2xf32>
    %84 = tpu.matmul %83, %82, %cst_23 {dimension_numbers = #tpu.dot_dimension_numbers<[1], [0], [0], [1], [0, 0, 1, 1], [], []>} : vector<10x50xf32>, vector<50x2xf32>, vector<10x2xf32> -> vector<10x2xf32>
    %c0_24 = arith.constant 0 : index
    %c0_25 = arith.constant 0 : index
    %85 = vector.load %arg10[%c0_24, %c0_25] : memref<10x1xf32, #tpu.memory_space<vmem>>, vector<10x1xf32>
    %86 = vector.broadcast %85 : vector<10x1xf32> to vector<10x2xf32>
    %87 = arith.addf %84, %86 : vector<10x2xf32>
    %cst_26 = arith.constant dense<0xFF800000> : vector<2xf32>
    %88 = vector.multi_reduction <maximumf>, %87, %cst_26 [0] : vector<10x2xf32> to vector<2xf32>
    %89 = vector.shape_cast %88 : vector<2xf32> to vector<1x2xf32>
    %90 = vector.broadcast %89 : vector<1x2xf32> to vector<10x2xf32>
    %91 = arith.subf %87, %90 : vector<10x2xf32>
    %92 = math.exp %91 : vector<10x2xf32>
    %cst_27 = arith.constant dense<0.000000e+00> : vector<2xf32>
    %93 = vector.multi_reduction <add>, %92, %cst_27 [0] : vector<10x2xf32> to vector<2xf32>
    %94 = vector.shape_cast %93 : vector<2xf32> to vector<1x2xf32>
    %95 = math.log %94 : vector<1x2xf32>
    %96 = vector.broadcast %95 : vector<1x2xf32> to vector<10x2xf32>
    %97 = arith.subf %91, %96 : vector<10x2xf32>
    %c0_28 = arith.constant 0 : index
    %c0_29 = arith.constant 0 : index
    %98 = vector.load %arg11[%c0_28, %c0_29] : memref<10x2xf32, #tpu.memory_space<vmem>>, vector<10x2xf32>
    tpu.vector_store %arg11[%c0_28, %c0_29], %97 {strides = array<i32>} : memref<10x2xf32, #tpu.memory_space<vmem>>, vector<10x2xf32>,
    return
  }
  func.func @transform_0(%arg0: i32) -> (i32, i32) {
    %c0_i32 = arith.constant 0 : i32
    %c0_i32_0 = arith.constant 0 : i32
    %c0_i32_1 = arith.constant 0 : i32
    return %c0_i32, %c0_i32_0 : i32, i32
  }
  func.func @transform_1(%arg0: i32) -> (i32, i32) {
    %c0_i32 = arith.constant 0 : i32
    %c0_i32_0 = arith.constant 0 : i32
    %c0_i32_1 = arith.constant 0 : i32
    return %c0_i32, %c0_i32_0 : i32, i32
  }
  func.func @transform_2(%arg0: i32) -> (i32, i32) {
    %c0_i32 = arith.constant 0 : i32
    %c0_i32_0 = arith.constant 0 : i32
    %c0_i32_1 = arith.constant 0 : i32
    return %c0_i32, %c0_i32_0 : i32, i32
  }
  func.func @transform_3(%arg0: i32) -> (i32, i32) {
    %c0_i32 = arith.constant 0 : i32
    %c0_i32_0 = arith.constant 0 : i32
    %c0_i32_1 = arith.constant 0 : i32
    return %c0_i32, %c0_i32_0 : i32, i32
  }
  func.func @transform_4(%arg0: i32) -> (i32, i32) {
    %c0_i32 = arith.constant 0 : i32
    %c0_i32_0 = arith.constant 0 : i32
    %c0_i32_1 = arith.constant 0 : i32
    return %c0_i32, %c0_i32_0 : i32, i32
  }
  func.func @transform_5(%arg0: i32) -> (i32, i32) {
    %c0_i32 = arith.constant 0 : i32
    %c0_i32_0 = arith.constant 0 : i32
    %c0_i32_1 = arith.constant 0 : i32
    return %c0_i32, %c0_i32_0 : i32, i32
  }
  func.func @transform_6(%arg0: i32) -> (i32, i32) {
    %c0_i32 = arith.constant 0 : i32
    %c0_i32_0 = arith.constant 0 : i32
    %c0_i32_1 = arith.constant 0 : i32
    return %c0_i32, %c0_i32_0 : i32, i32
  }
  func.func @transform_7(%arg0: i32) -> (i32, i32) {
    %c0_i32 = arith.constant 0 : i32
    %c0_i32_0 = arith.constant 0 : i32
    %c0_i32_1 = arith.constant 0 : i32
    return %c0_i32, %c0_i32_0 : i32, i32
  }
  func.func @transform_8(%arg0: i32) -> (i32, i32) {
    %c0_i32 = arith.constant 0 : i32
    %c0_i32_0 = arith.constant 0 : i32
    %c0_i32_1 = arith.constant 0 : i32
    return %c0_i32, %c0_i32_0 : i32, i32
  }
  func.func @transform_9(%arg0: i32) -> (i32, i32) {
    %c0_i32 = arith.constant 0 : i32
    %c0_i32_0 = arith.constant 0 : i32
    %c0_i32_1 = arith.constant 0 : i32
    return %c0_i32, %c0_i32_0 : i32, i32
  }
  func.func @transform_10(%arg0: i32) -> (i32, i32) {
    %c0_i32 = arith.constant 0 : i32
    %c0_i32_0 = arith.constant 0 : i32
    %c0_i32_1 = arith.constant 0 : i32
    return %c0_i32, %c0_i32_0 : i32, i32
  }
}

</mosaic_0001>

<llo_original>
// kernel: net_forward.1
$region0: #{net_forward.1}
  #allocation0 [shape = 'u32[]', space=smem, size = 0x4, offset = 0x4, fixed_abs, tag = 'smem constant byte address 0x4 - core index']
  #allocation1 [shape = 'u32[72,128]{1,0:T(1,128)}', space=vmem, size = 0x9000, scoped, tag = 'internal scratch']
  %s0 = inlined_call_operand.vmem [shape: f32[32,1248], index: 0, kind: input, shape index: {}]
  %s1 = inlined_call_operand.vmem [shape: f32[16,32], index: 1, kind: input, shape index: {}]
  %s2 = inlined_call_operand.vmem [shape: f32[16,1], index: 2, kind: input, shape index: {}]
  %s3 = inlined_call_operand.vmem [shape: f32[24,400], index: 3, kind: input, shape index: {}]
  %s4 = inlined_call_operand.vmem [shape: f32[24,1], index: 4, kind: input, shape index: {}]
  %s5 = inlined_call_operand.vmem [shape: f32[288,32], index: 5, kind: input, shape index: {}]
  %s6 = inlined_call_operand.vmem [shape: f32[50,384], index: 6, kind: input, shape index: {}]
  %s7 = inlined_call_operand.vmem [shape: f32[50,1], index: 7, kind: input, shape index: {}]
  %s8 = inlined_call_operand.vmem [shape: f32[10,50], index: 8, kind: input, shape index: {}]
  %s9 = inlined_call_operand.vmem [shape: f32[10,1], index: 9, kind: input, shape index: {}]
  %s10 = inlined_call_operand.vmem [shape: f32[10,2], index: 10, kind: output, shape index: {}]
  %s11 = sld [smem:[#allocation0]]
  $region50: #{net_forward.1} parent=0
    _
  %s13 = ssub.s32 1, %s11
  %s14 = scalar_select 0, %s13, %s11
  // Predicated region
  $region2: #{net_forward.1} parent=0 // pred_check
    _
  $region3: #{net_forward.1} parent=0 // pred_check_branch
    %16 = sbr.rel (0) target = $region5
  $region4: #{net_forward.1} parent=0 // pred_region
    _
  $region5: #{net_forward.1} parent=0 // pred_fallthru
    _
  // Predicated region
  $region6: #{net_forward.1} parent=0 // pred_check
    _
  $region7: #{net_forward.1} parent=0 // pred_check_branch
    %18 = sbr.rel (0) target = $region9
  $region8: #{net_forward.1} parent=0 // pred_region
    _
  $region9: #{net_forward.1} parent=0 // pred_fallthru
    _
  // Predicated region
  $region10: #{net_forward.1} parent=0 // pred_check
    _
  $region11: #{net_forward.1} parent=0 // pred_check_branch
    %20 = sbr.rel (0) target = $region13
  $region12: #{net_forward.1} parent=0 // pred_region
    _
  $region13: #{net_forward.1} parent=0 // pred_fallthru
    _
  // Predicated region
  $region14: #{net_forward.1} parent=0 // pred_check
    _
  $region15: #{net_forward.1} parent=0 // pred_check_branch
    %22 = sbr.rel (0) target = $region17
  $region16: #{net_forward.1} parent=0 // pred_region
    _
  $region17: #{net_forward.1} parent=0 // pred_fallthru
    _
  // Predicated region
  $region18: #{net_forward.1} parent=0 // pred_check
    _
  $region19: #{net_forward.1} parent=0 // pred_check_branch
    %24 = sbr.rel (0) target = $region21
  $region20: #{net_forward.1} parent=0 // pred_region
    _
  $region21: #{net_forward.1} parent=0 // pred_fallthru
    _
  // Predicated region
  $region22: #{net_forward.1} parent=0 // pred_check
    _
  $region23: #{net_forward.1} parent=0 // pred_check_branch
    %26 = sbr.rel (0) target = $region25
  $region24: #{net_forward.1} parent=0 // pred_region
    _
  $region25: #{net_forward.1} parent=0 // pred_fallthru
    _
  // Predicated region
  $region26: #{net_forward.1} parent=0 // pred_check
    _
  $region27: #{net_forward.1} parent=0 // pred_check_branch
    %28 = sbr.rel (0) target = $region29
  $region28: #{net_forward.1} parent=0 // pred_region
    _
  $region29: #{net_forward.1} parent=0 // pred_fallthru
    _
  // Predicated region
  $region30: #{net_forward.1} parent=0 // pred_check
    _
  $region31: #{net_forward.1} parent=0 // pred_check_branch
    %30 = sbr.rel (0) target = $region33
  $region32: #{net_forward.1} parent=0 // pred_region
    _
  $region33: #{net_forward.1} parent=0 // pred_fallthru
    _
  // Predicated region
  $region34: #{net_forward.1} parent=0 // pred_check
    _
  $region35: #{net_forward.1} parent=0 // pred_check_branch
    %32 = sbr.rel (0) target = $region37
  $region36: #{net_forward.1} parent=0 // pred_region
    _
  $region37: #{net_forward.1} parent=0 // pred_fallthru
    _
  // Predicated region
  $region38: #{net_forward.1} parent=0 // pred_check
    _
  $region39: #{net_forward.1} parent=0 // pred_check_branch
    %34 = sbr.rel (0) target = $region41
  $region40: #{net_forward.1} parent=0 // pred_region
    _
  $region41: #{net_forward.1} parent=0 // pred_fallthru
    _
  %v35 = vld [vmem:[%s1] sm:$0xff]
  %v36 = vld [vmem:[%s1 + $0x8] sm:$0xff]
  %v37 = vld [vmem:[%s0] sm:$0xff]
  %v38 = vld [vmem:[%s0 + $0x8] sm:$0xff]
  %v39 = vld [vmem:[%s0 + $0x10] sm:$0xff]
  %v40 = vld [vmem:[%s0 + $0x18] sm:$0xff]
  %v41 = vld [vmem:[%s0 + $0x20] sm:$0xff]
  %v42 = vld [vmem:[%s0 + $0x28] sm:$0xff]
  %v43 = vld [vmem:[%s0 + $0x30] sm:$0xff]
  %v44 = vld [vmem:[%s0 + $0x38] sm:$0xff]
  %v45 = vld [vmem:[%s0 + $0x40] sm:$0xff]
  %v46 = vld [vmem:[%s0 + $0x48] sm:$0xff]
  %v47 = vld [vmem:[%s0 + $0x50] sm:$0xff]
  %v48 = vld [vmem:[%s0 + $0x58] sm:$0xff]
  %v49 = vld [vmem:[%s0 + $0x60] sm:$0xff]
  %v50 = vld [vmem:[%s0 + $0x68] sm:$0xff]
  %v51 = vld [vmem:[%s0 + $0x70] sm:$0xff]
  %v52 = vld [vmem:[%s0 + $0x78] sm:$0xff]
  %v53 = vld [vmem:[%s0 + $0x80] sm:$0xff]
  %v54 = vld [vmem:[%s0 + $0x88] sm:$0xff]
  %v55 = vld [vmem:[%s0 + $0x90] sm:$0xff]
  %v56 = vld [vmem:[%s0 + $0x98] sm:$0xff]
  %v57 = vld [vmem:[%s0 + $0xa0] sm:$0xff]
  %v58 = vld [vmem:[%s0 + $0xa8] sm:$0xff]
  %v59 = vld [vmem:[%s0 + $0xb0] sm:$0xff]
  %v60 = vld [vmem:[%s0 + $0xb8] sm:$0xff]
  %v61 = vld [vmem:[%s0 + $0xc0] sm:$0xff]
  %v62 = vld [vmem:[%s0 + $0xc8] sm:$0xff]
  %v63 = vld [vmem:[%s0 + $0xd0] sm:$0xff]
  %v64 = vld [vmem:[%s0 + $0xd8] sm:$0xff]
  %v65 = vld [vmem:[%s0 + $0xe0] sm:$0xff]
  %v66 = vld [vmem:[%s0 + $0xe8] sm:$0xff]
  %v67 = vld [vmem:[%s0 + $0xf0] sm:$0xff]
  %v68 = vld [vmem:[%s0 + $0xf8] sm:$0xff]
  %v69 = vld [vmem:[%s0 + $0x100] sm:$0xff]
  %v70 = vld [vmem:[%s0 + $0x108] sm:$0xff]
  %v71 = vld [vmem:[%s0 + $0x110] sm:$0xff]
  %v72 = vld [vmem:[%s0 + $0x118] sm:$0xff]
  %v73 = vld [vmem:[%s0 + $0x120] sm:$0xff]
  %v74 = vld [vmem:[%s0 + $0x128] sm:$0xff]
  %v75 = vld [vmem:[%s0 + $0x130] sm:$0xff]
  %v76 = vld [vmem:[%s0 + $0x138] sm:$0xff]
  %v77 = vld [vmem:[%s2] sm:$0xff]
  %v78 = vld [vmem:[%s2 + $0x8] sm:$0xff]
  %80 = vset.pattern.permute.xlu0 0
  %81 = vperm.xlu0 %80, %v77
  %v82 = vpop.permute.xlu0 %81
  %85 = vset.pattern.permute.xlu0 0
  %86 = vperm.xlu0 %85, %v78
  %v87 = vpop.permute.xlu0 %86
  %vm89 = vcmask 261120
  %v91 = vsel %vm89, %v35, 0
  %v94 = vsel %vm89, %v36, 0
  %96 = vmatpush.msra.mxu0 0.0
  %97 = vmatpush.msra.mxu0 0.0
  %98 = vmatpush.msra.mxu0 0.0
  %99 = vmatpush.msra.mxu0 0.0
  %100 = vmatpush.msra.mxu0 0.0
  %101 = vmatpush.msra.mxu0 0.0
  %102 = vmatpush.msra.mxu0 0.0
  %103 = vmatpush.msra.mxu0 0.0
  %104 = vmatpush.msra.mxu0 0.0
  %105 = vmatpush.msra.mxu0 0.0
  %106 = vmatpush.msra.mxu0 0.0
  %107 = vmatpush.msra.mxu0 0.0
  %108 = vmatpush.msra.mxu0 %v67
  %109 = vmatpush.msra.mxu0 %v57
  %110 = vmatpush.msra.mxu0 %v47
  %111 = vmatpush.msra.mxu0 %v37
  %112 = vmatmul.f32.gmra.mxu0 %v91
  %v113 = vpop.f32.mrf.mxu0
  %v114 = vadd.f32 %v82, %v113
  %115 = vmatmul.f32.gmra.mxu0 %v94
  %v116 = vpop.f32.mrf.mxu0
  %v117 = vadd.f32 %v87, %v116
  %118 = vdwg.mxu0
  %119 = vmatpush.msra.mxu0 0.0
  %120 = vmatpush.msra.mxu0 0.0
  %121 = vmatpush.msra.mxu0 0.0
  %122 = vmatpush.msra.mxu0 0.0
  %123 = vmatpush.msra.mxu0 0.0
  %124 = vmatpush.msra.mxu0 0.0
  %125 = vmatpush.msra.mxu0 0.0
  %126 = vmatpush.msra.mxu0 0.0
  %127 = vmatpush.msra.mxu0 0.0
  %128 = vmatpush.msra.mxu0 0.0
  %129 = vmatpush.msra.mxu0 0.0
  %130 = vmatpush.msra.mxu0 0.0
  %131 = vmatpush.msra.mxu0 %v68
  %132 = vmatpush.msra.mxu0 %v58
  %133 = vmatpush.msra.mxu0 %v48
  %134 = vmatpush.msra.mxu0 %v38
  %135 = vmatmul.f32.gmra.mxu0 %v91
  %v136 = vpop.f32.mrf.mxu0
  %v137 = vadd.f32 %v82, %v136
  %138 = vmatmul.f32.gmra.mxu0 %v94
  %v139 = vpop.f32.mrf.mxu0
  %v140 = vadd.f32 %v87, %v139
  %141 = vdwg.mxu0
  %142 = vmatpush.msra.mxu0 0.0
  %143 = vmatpush.msra.mxu0 0.0
  %144 = vmatpush.msra.mxu0 0.0
  %145 = vmatpush.msra.mxu0 0.0
  %146 = vmatpush.msra.mxu0 0.0
  %147 = vmatpush.msra.mxu0 0.0
  %148 = vmatpush.msra.mxu0 0.0
  %149 = vmatpush.msra.mxu0 0.0
  %150 = vmatpush.msra.mxu0 0.0
  %151 = vmatpush.msra.mxu0 0.0
  %152 = vmatpush.msra.mxu0 0.0
  %153 = vmatpush.msra.mxu0 0.0
  %154 = vmatpush.msra.mxu0 %v69
  %155 = vmatpush.msra.mxu0 %v59
  %156 = vmatpush.msra.mxu0 %v49
  %157 = vmatpush.msra.mxu0 %v39
  %158 = vmatmul.f32.gmra.mxu0 %v91
  %v159 = vpop.f32.mrf.mxu0
  %v160 = vadd.f32 %v82, %v159
  %161 = vmatmul.f32.gmra.mxu0 %v94
  %v162 = vpop.f32.mrf.mxu0
  %v163 = vadd.f32 %v87, %v162
  %164 = vdwg.mxu0
  %165 = vmatpush.msra.mxu0 0.0
  %166 = vmatpush.msra.mxu0 0.0
  %167 = vmatpush.msra.mxu0 0.0
  %168 = vmatpush.msra.mxu0 0.0
  %169 = vmatpush.msra.mxu0 0.0
  %170 = vmatpush.msra.mxu0 0.0
  %171 = vmatpush.msra.mxu0 0.0
  %172 = vmatpush.msra.mxu0 0.0
  %173 = vmatpush.msra.mxu0 0.0
  %174 = vmatpush.msra.mxu0 0.0
  %175 = vmatpush.msra.mxu0 0.0
  %176 = vmatpush.msra.mxu0 0.0
  %177 = vmatpush.msra.mxu0 %v70
  %178 = vmatpush.msra.mxu0 %v60
  %179 = vmatpush.msra.mxu0 %v50
  %180 = vmatpush.msra.mxu0 %v40
  %181 = vmatmul.f32.gmra.mxu0 %v91
  %v182 = vpop.f32.mrf.mxu0
  %v183 = vadd.f32 %v82, %v182
  %184 = vmatmul.f32.gmra.mxu0 %v94
  %v185 = vpop.f32.mrf.mxu0
  %v186 = vadd.f32 %v87, %v185
  %187 = vdwg.mxu0
  %188 = vmatpush.msra.mxu0 0.0
  %189 = vmatpush.msra.mxu0 0.0
  %190 = vmatpush.msra.mxu0 0.0
  %191 = vmatpush.msra.mxu0 0.0
  %192 = vmatpush.msra.mxu0 0.0
  %193 = vmatpush.msra.mxu0 0.0
  %194 = vmatpush.msra.mxu0 0.0
  %195 = vmatpush.msra.mxu0 0.0
  %196 = vmatpush.msra.mxu0 0.0
  %197 = vmatpush.msra.mxu0 0.0
  %198 = vmatpush.msra.mxu0 0.0
  %199 = vmatpush.msra.mxu0 0.0
  %200 = vmatpush.msra.mxu0 %v71
  %201 = vmatpush.msra.mxu0 %v61
  %202 = vmatpush.msra.mxu0 %v51
  %203 = vmatpush.msra.mxu0 %v41
  %204 = vmatmul.f32.gmra.mxu0 %v91
  %v205 = vpop.f32.mrf.mxu0
  %v206 = vadd.f32 %v82, %v205
  %207 = vmatmul.f32.gmra.mxu0 %v94
  %v208 = vpop.f32.mrf.mxu0
  %v209 = vadd.f32 %v87, %v208
  %210 = vdwg.mxu0
  %211 = vmatpush.msra.mxu0 0.0
  %212 = vmatpush.msra.mxu0 0.0
  %213 = vmatpush.msra.mxu0 0.0
  %214 = vmatpush.msra.mxu0 0.0
  %215 = vmatpush.msra.mxu0 0.0
  %216 = vmatpush.msra.mxu0 0.0
  %217 = vmatpush.msra.mxu0 0.0
  %218 = vmatpush.msra.mxu0 0.0
  %219 = vmatpush.msra.mxu0 0.0
  %220 = vmatpush.msra.mxu0 0.0
  %221 = vmatpush.msra.mxu0 0.0
  %222 = vmatpush.msra.mxu0 0.0
  %223 = vmatpush.msra.mxu0 %v72
  %224 = vmatpush.msra.mxu0 %v62
  %225 = vmatpush.msra.mxu0 %v52
  %226 = vmatpush.msra.mxu0 %v42
  %227 = vmatmul.f32.gmra.mxu0 %v91
  %v228 = vpop.f32.mrf.mxu0
  %v229 = vadd.f32 %v82, %v228
  %230 = vmatmul.f32.gmra.mxu0 %v94
  %v231 = vpop.f32.mrf.mxu0
  %v232 = vadd.f32 %v87, %v231
  %233 = vdwg.mxu0
  %234 = vmatpush.msra.mxu0 0.0
  %235 = vmatpush.msra.mxu0 0.0
  %236 = vmatpush.msra.mxu0 0.0
  %237 = vmatpush.msra.mxu0 0.0
  %238 = vmatpush.msra.mxu0 0.0
  %239 = vmatpush.msra.mxu0 0.0
  %240 = vmatpush.msra.mxu0 0.0
  %241 = vmatpush.msra.mxu0 0.0
  %242 = vmatpush.msra.mxu0 0.0
  %243 = vmatpush.msra.mxu0 0.0
  %244 = vmatpush.msra.mxu0 0.0
  %245 = vmatpush.msra.mxu0 0.0
  %246 = vmatpush.msra.mxu0 %v73
  %247 = vmatpush.msra.mxu0 %v63
  %248 = vmatpush.msra.mxu0 %v53
  %249 = vmatpush.msra.mxu0 %v43
  %250 = vmatmul.f32.gmra.mxu0 %v91
  %v251 = vpop.f32.mrf.mxu0
  %v252 = vadd.f32 %v82, %v251
  %253 = vmatmul.f32.gmra.mxu0 %v94
  %v254 = vpop.f32.mrf.mxu0
  %v255 = vadd.f32 %v87, %v254
  %256 = vdwg.mxu0
  %257 = vmatpush.msra.mxu0 0.0
  %258 = vmatpush.msra.mxu0 0.0
  %259 = vmatpush.msra.mxu0 0.0
  %260 = vmatpush.msra.mxu0 0.0
  %261 = vmatpush.msra.mxu0 0.0
  %262 = vmatpush.msra.mxu0 0.0
  %263 = vmatpush.msra.mxu0 0.0
  %264 = vmatpush.msra.mxu0 0.0
  %265 = vmatpush.msra.mxu0 0.0
  %266 = vmatpush.msra.mxu0 0.0
  %267 = vmatpush.msra.mxu0 0.0
  %268 = vmatpush.msra.mxu0 0.0
  %269 = vmatpush.msra.mxu0 %v74
  %270 = vmatpush.msra.mxu0 %v64
  %271 = vmatpush.msra.mxu0 %v54
  %272 = vmatpush.msra.mxu0 %v44
  %273 = vmatmul.f32.gmra.mxu0 %v91
  %v274 = vpop.f32.mrf.mxu0
  %v275 = vadd.f32 %v82, %v274
  %276 = vmatmul.f32.gmra.mxu0 %v94
  %v277 = vpop.f32.mrf.mxu0
  %v278 = vadd.f32 %v87, %v277
  %279 = vdwg.mxu0
  %280 = vmatpush.msra.mxu0 0.0
  %281 = vmatpush.msra.mxu0 0.0
  %282 = vmatpush.msra.mxu0 0.0
  %283 = vmatpush.msra.mxu0 0.0
  %284 = vmatpush.msra.mxu0 0.0
  %285 = vmatpush.msra.mxu0 0.0
  %286 = vmatpush.msra.mxu0 0.0
  %287 = vmatpush.msra.mxu0 0.0
  %288 = vmatpush.msra.mxu0 0.0
  %289 = vmatpush.msra.mxu0 0.0
  %290 = vmatpush.msra.mxu0 0.0
  %291 = vmatpush.msra.mxu0 0.0
  %292 = vmatpush.msra.mxu0 %v75
  %293 = vmatpush.msra.mxu0 %v65
  %294 = vmatpush.msra.mxu0 %v55
  %295 = vmatpush.msra.mxu0 %v45
  %296 = vmatmul.f32.gmra.mxu0 %v91
  %v297 = vpop.f32.mrf.mxu0
  %v298 = vadd.f32 %v82, %v297
  %299 = vmatmul.f32.gmra.mxu0 %v94
  %v300 = vpop.f32.mrf.mxu0
  %v301 = vadd.f32 %v87, %v300
  %302 = vdwg.mxu0
  %303 = vmatpush.msra.mxu0 0.0
  %304 = vmatpush.msra.mxu0 0.0
  %305 = vmatpush.msra.mxu0 0.0
  %306 = vmatpush.msra.mxu0 0.0
  %307 = vmatpush.msra.mxu0 0.0
  %308 = vmatpush.msra.mxu0 0.0
  %309 = vmatpush.msra.mxu0 0.0
  %310 = vmatpush.msra.mxu0 0.0
  %311 = vmatpush.msra.mxu0 0.0
  %312 = vmatpush.msra.mxu0 0.0
  %313 = vmatpush.msra.mxu0 0.0
  %314 = vmatpush.msra.mxu0 0.0
  %315 = vmatpush.msra.mxu0 %v76
  %316 = vmatpush.msra.mxu0 %v66
  %317 = vmatpush.msra.mxu0 %v56
  %318 = vmatpush.msra.mxu0 %v46
  %319 = vmatmul.f32.gmra.mxu0 %v91
  %v320 = vpop.f32.mrf.mxu0
  %v321 = vadd.f32 %v82, %v320
  %322 = vmatmul.f32.gmra.mxu0 %v94
  %v323 = vpop.f32.mrf.mxu0
  %v324 = vadd.f32 %v87, %v323
  %325 = vdwg.mxu0
  %334 = vrot.lane.b32.xlu0 %v160, 96
  %v335 = vpop.permute.xlu0 %334
  %336 = vrot.lane.b32.xlu0 %v183, 96
  %v337 = vpop.permute.xlu0 %336
  %338 = vrot.lane.b32.xlu0 %v206, 96
  %v339 = vpop.permute.xlu0 %338
  %340 = vrot.lane.b32.xlu0 %v229, 96
  %v341 = vpop.permute.xlu0 %340
  %342 = vrot.lane.b32.xlu0 %v163, 96
  %v343 = vpop.permute.xlu0 %342
  %344 = vrot.lane.b32.xlu0 %v186, 96
  %v345 = vpop.permute.xlu0 %344
  %346 = vrot.lane.b32.xlu0 %v209, 96
  %v347 = vpop.permute.xlu0 %346
  %348 = vrot.lane.b32.xlu0 %v232, 96
  %v349 = vpop.permute.xlu0 %348
  %vm350 = vcmask 785408
  %v351 = vsel %vm350, %v335, %v337
  %v352 = vsel %vm350, %v337, %v339
  %v353 = vsel %vm350, %v339, %v341
  %v354 = vsel %vm350, %v343, %v345
  %v355 = vsel %vm350, %v345, %v347
  %v356 = vsel %vm350, %v347, %v349
  %v363 = vmax.f32 %v114, %v351
  %v364 = vmax.f32 %v137, %v352
  %v365 = vmax.f32 %v160, %v353
  %v366 = vmax.f32 %v117, %v354
  %v367 = vmax.f32 %v140, %v355
  %v368 = vmax.f32 %v163, %v356
  %377 = vrot.lane.b32.xlu0 %v252, 96
  %v378 = vpop.permute.xlu0 %377
  %379 = vrot.lane.b32.xlu0 %v275, 96
  %v380 = vpop.permute.xlu0 %379
  %381 = vrot.lane.b32.xlu0 %v298, 96
  %v382 = vpop.permute.xlu0 %381
  %383 = vrot.lane.b32.xlu0 %v321, 96
  %v384 = vpop.permute.xlu0 %383
  %385 = vrot.lane.b32.xlu0 %v255, 96
  %v386 = vpop.permute.xlu0 %385
  %387 = vrot.lane.b32.xlu0 %v278, 96
  %v388 = vpop.permute.xlu0 %387
  %389 = vrot.lane.b32.xlu0 %v301, 96
  %v390 = vpop.permute.xlu0 %389
  %391 = vrot.lane.b32.xlu0 %v324, 96
  %v392 = vpop.permute.xlu0 %391
  %v393 = vsel %vm350, %v378, %v380
  %v394 = vsel %vm350, %v380, %v382
  %v395 = vsel %vm350, %v382, %v384
  %v396 = vsel %vm350, %v386, %v388
  %v397 = vsel %vm350, %v388, %v390
  %v398 = vsel %vm350, %v390, %v392
  %v407 = vmax.f32 %v206, %v393
  %v408 = vmax.f32 %v229, %v394
  %v409 = vmax.f32 %v252, %v395
  %v410 = vmax.f32 %v275, %v384
  %v411 = vmax.f32 %v209, %v396
  %v412 = vmax.f32 %v232, %v397
  %v413 = vmax.f32 %v255, %v398
  %v414 = vmax.f32 %v278, %v392
  %423 = vrot.lane.b32.xlu0 %v407, 64
  %v424 = vpop.permute.xlu0 %423
  %425 = vrot.lane.b32.xlu0 %v408, 64
  %v426 = vpop.permute.xlu0 %425
  %427 = vrot.lane.b32.xlu0 %v409, 64
  %v428 = vpop.permute.xlu0 %427
  %429 = vrot.lane.b32.xlu0 %v410, 64
  %v430 = vpop.permute.xlu0 %429
  %431 = vrot.lane.b32.xlu0 %v411, 64
  %v432 = vpop.permute.xlu0 %431
  %433 = vrot.lane.b32.xlu0 %v412, 64
  %v434 = vpop.permute.xlu0 %433
  %435 = vrot.lane.b32.xlu0 %v413, 64
  %v436 = vpop.permute.xlu0 %435
  %437 = vrot.lane.b32.xlu0 %v414, 64
  %v438 = vpop.permute.xlu0 %437
  %vm439 = vcmask 523264
  %v440 = vsel %vm439, %v424, %v426
  %v441 = vsel %vm439, %v426, %v428
  %v442 = vsel %vm439, %v428, %v430
  %v443 = vsel %vm439, %v432, %v434
  %v444 = vsel %vm439, %v434, %v436
  %v445 = vsel %vm439, %v436, %v438
  %v452 = vmax.f32 %v363, %v440
  %v453 = vmax.f32 %v364, %v441
  %v454 = vmax.f32 %v365, %v442
  %v455 = vmax.f32 %v366, %v443
  %v456 = vmax.f32 %v367, %v444
  %v457 = vmax.f32 %v368, %v445
  %v458 = vmax.f32 %v452, 0.0
  %v459 = vmax.f32 %v453, 0.0
  %v460 = vmax.f32 %v454, 0.0
  %v461 = vmax.f32 %v455, 0.0
  %v462 = vmax.f32 %v456, 0.0
  %v463 = vmax.f32 %v457, 0.0
  %470 = vrot.lane.b32.xlu0 %v458, 127
  %v471 = vpop.permute.xlu0 %470
  %472 = vrot.lane.b32.xlu0 %v459, 127
  %v473 = vpop.permute.xlu0 %472
  %474 = vrot.lane.b32.xlu0 %v460, 127
  %v475 = vpop.permute.xlu0 %474
  %476 = vrot.lane.b32.xlu0 %v461, 127
  %v477 = vpop.permute.xlu0 %476
  %478 = vrot.lane.b32.xlu0 %v462, 127
  %v479 = vpop.permute.xlu0 %478
  %480 = vrot.lane.b32.xlu0 %v463, 127
  %v481 = vpop.permute.xlu0 %480
  %vm482 = vcmask 1039360
  %v483 = vsel %vm482, %v471, %v473
  %v484 = vsel %vm482, %v473, %v475
  %v485 = vsel %vm482, %v477, %v479
  %v486 = vsel %vm482, %v479, %v481
  %493 = vrot.lane.b32.xlu0 %v458, 126
  %v494 = vpop.permute.xlu0 %493
  %495 = vrot.lane.b32.xlu0 %v459, 126
  %v496 = vpop.permute.xlu0 %495
  %497 = vrot.lane.b32.xlu0 %v460, 126
  %v498 = vpop.permute.xlu0 %497
  %499 = vrot.lane.b32.xlu0 %v461, 126
  %v500 = vpop.permute.xlu0 %499
  %501 = vrot.lane.b32.xlu0 %v462, 126
  %v502 = vpop.permute.xlu0 %501
  %503 = vrot.lane.b32.xlu0 %v463, 126
  %v504 = vpop.permute.xlu0 %503
  %vm505 = vcmask 1031168
  %v506 = vsel %vm505, %v494, %v496
  %v507 = vsel %vm505, %v496, %v498
  %v508 = vsel %vm505, %v500, %v502
  %v509 = vsel %vm505, %v502, %v504
  %516 = vrot.lane.b32.xlu0 %v458, 125
  %v517 = vpop.permute.xlu0 %516
  %518 = vrot.lane.b32.xlu0 %v459, 125
  %v519 = vpop.permute.xlu0 %518
  %520 = vrot.lane.b32.xlu0 %v460, 125
  %v521 = vpop.permute.xlu0 %520
  %522 = vrot.lane.b32.xlu0 %v461, 125
  %v523 = vpop.permute.xlu0 %522
  %524 = vrot.lane.b32.xlu0 %v462, 125
  %v525 = vpop.permute.xlu0 %524
  %526 = vrot.lane.b32.xlu0 %v463, 125
  %v527 = vpop.permute.xlu0 %526
  %vm528 = vcmask 1022976
  %v529 = vsel %vm528, %v517, %v519
  %v530 = vsel %vm528, %v519, %v521
  %v531 = vsel %vm528, %v523, %v525
  %v532 = vsel %vm528, %v525, %v527
  %539 = vrot.lane.b32.xlu0 %v458, 124
  %v540 = vpop.permute.xlu0 %539
  %541 = vrot.lane.b32.xlu0 %v459, 124
  %v542 = vpop.permute.xlu0 %541
  %543 = vrot.lane.b32.xlu0 %v460, 124
  %v544 = vpop.permute.xlu0 %543
  %545 = vrot.lane.b32.xlu0 %v461, 124
  %v546 = vpop.permute.xlu0 %545
  %547 = vrot.lane.b32.xlu0 %v462, 124
  %v548 = vpop.permute.xlu0 %547
  %549 = vrot.lane.b32.xlu0 %v463, 124
  %v550 = vpop.permute.xlu0 %549
  %vm551 = vcmask 1014784
  %v552 = vsel %vm551, %v540, %v542
  %v553 = vsel %vm551, %v542, %v544
  %v554 = vsel %vm551, %v546, %v548
  %v555 = vsel %vm551, %v548, %v550
  %562 = vrot.lane.b32.xlu0 %v458, 116
  %v563 = vpop.permute.xlu0 %562
  %564 = vrot.lane.b32.xlu0 %v459, 116
  %v565 = vpop.permute.xlu0 %564
  %566 = vrot.lane.b32.xlu0 %v460, 116
  %v567 = vpop.permute.xlu0 %566
  %568 = vrot.lane.b32.xlu0 %v461, 116
  %v569 = vpop.permute.xlu0 %568
  %570 = vrot.lane.b32.xlu0 %v462, 116
  %v571 = vpop.permute.xlu0 %570
  %572 = vrot.lane.b32.xlu0 %v463, 116
  %v573 = vpop.permute.xlu0 %572
  %vm574 = vcmask 949248
  %v575 = vsel %vm574, %v563, %v565
  %v576 = vsel %vm574, %v565, %v567
  %v577 = vsel %vm574, %v569, %v571
  %v578 = vsel %vm574, %v571, %v573
  %585 = vrot.lane.b32.xlu0 %v458, 115
  %v586 = vpop.permute.xlu0 %585
  %587 = vrot.lane.b32.xlu0 %v459, 115
  %v588 = vpop.permute.xlu0 %587
  %589 = vrot.lane.b32.xlu0 %v460, 115
  %v590 = vpop.permute.xlu0 %589
  %591 = vrot.lane.b32.xlu0 %v461, 115
  %v592 = vpop.permute.xlu0 %591
  %593 = vrot.lane.b32.xlu0 %v462, 115
  %v594 = vpop.permute.xlu0 %593
  %595 = vrot.lane.b32.xlu0 %v463, 115
  %v596 = vpop.permute.xlu0 %595
  %vm597 = vcmask 941056
  %v598 = vsel %vm597, %v586, %v588
  %v599 = vsel %vm597, %v588, %v590
  %v600 = vsel %vm597, %v592, %v594
  %v601 = vsel %vm597, %v594, %v596
  %608 = vrot.lane.b32.xlu0 %v458, 114
  %v609 = vpop.permute.xlu0 %608
  %610 = vrot.lane.b32.xlu0 %v459, 114
  %v611 = vpop.permute.xlu0 %610
  %612 = vrot.lane.b32.xlu0 %v460, 114
  %v613 = vpop.permute.xlu0 %612
  %614 = vrot.lane.b32.xlu0 %v461, 114
  %v615 = vpop.permute.xlu0 %614
  %616 = vrot.lane.b32.xlu0 %v462, 114
  %v617 = vpop.permute.xlu0 %616
  %618 = vrot.lane.b32.xlu0 %v463, 114
  %v619 = vpop.permute.xlu0 %618
  %vm620 = vcmask 932864
  %v621 = vsel %vm620, %v609, %v611
  %v622 = vsel %vm620, %v611, %v613
  %v623 = vsel %vm620, %v615, %v617
  %v624 = vsel %vm620, %v617, %v619
  %631 = vrot.lane.b32.xlu0 %v458, 113
  %v632 = vpop.permute.xlu0 %631
  %633 = vrot.lane.b32.xlu0 %v459, 113
  %v634 = vpop.permute.xlu0 %633
  %635 = vrot.lane.b32.xlu0 %v460, 113
  %v636 = vpop.permute.xlu0 %635
  %637 = vrot.lane.b32.xlu0 %v461, 113
  %v638 = vpop.permute.xlu0 %637
  %639 = vrot.lane.b32.xlu0 %v462, 113
  %v640 = vpop.permute.xlu0 %639
  %641 = vrot.lane.b32.xlu0 %v463, 113
  %v642 = vpop.permute.xlu0 %641
  %vm643 = vcmask 924672
  %v644 = vsel %vm643, %v632, %v634
  %v645 = vsel %vm643, %v634, %v636
  %v646 = vsel %vm643, %v638, %v640
  %v647 = vsel %vm643, %v640, %v642
  %654 = vrot.lane.b32.xlu0 %v458, 112
  %v655 = vpop.permute.xlu0 %654
  %656 = vrot.lane.b32.xlu0 %v459, 112
  %v657 = vpop.permute.xlu0 %656
  %658 = vrot.lane.b32.xlu0 %v460, 112
  %v659 = vpop.permute.xlu0 %658
  %660 = vrot.lane.b32.xlu0 %v461, 112
  %v661 = vpop.permute.xlu0 %660
  %662 = vrot.lane.b32.xlu0 %v462, 112
  %v663 = vpop.permute.xlu0 %662
  %664 = vrot.lane.b32.xlu0 %v463, 112
  %v665 = vpop.permute.xlu0 %664
  %vm666 = vcmask 916480
  %v667 = vsel %vm666, %v655, %v657
  %v668 = vsel %vm666, %v657, %v659
  %v669 = vsel %vm666, %v661, %v663
  %v670 = vsel %vm666, %v663, %v665
  %677 = vrot.lane.b32.xlu0 %v458, 104
  %v678 = vpop.permute.xlu0 %677
  %679 = vrot.lane.b32.xlu0 %v459, 104
  %v680 = vpop.permute.xlu0 %679
  %681 = vrot.lane.b32.xlu0 %v460, 104
  %v682 = vpop.permute.xlu0 %681
  %683 = vrot.lane.b32.xlu0 %v461, 104
  %v684 = vpop.permute.xlu0 %683
  %685 = vrot.lane.b32.xlu0 %v462, 104
  %v686 = vpop.permute.xlu0 %685
  %687 = vrot.lane.b32.xlu0 %v463, 104
  %v688 = vpop.permute.xlu0 %687
  %vm689 = vcmask 850944
  %v690 = vsel %vm689, %v678, %v680
  %v691 = vsel %vm689, %v680, %v682
  %v692 = vsel %vm689, %v684, %v686
  %v693 = vsel %vm689, %v686, %v688
  %700 = vrot.lane.b32.xlu0 %v458, 103
  %v701 = vpop.permute.xlu0 %700
  %702 = vrot.lane.b32.xlu0 %v459, 103
  %v703 = vpop.permute.xlu0 %702
  %704 = vrot.lane.b32.xlu0 %v460, 103
  %v705 = vpop.permute.xlu0 %704
  %706 = vrot.lane.b32.xlu0 %v461, 103
  %v707 = vpop.permute.xlu0 %706
  %708 = vrot.lane.b32.xlu0 %v462, 103
  %v709 = vpop.permute.xlu0 %708
  %710 = vrot.lane.b32.xlu0 %v463, 103
  %v711 = vpop.permute.xlu0 %710
  %vm712 = vcmask 842752
  %v713 = vsel %vm712, %v701, %v703
  %v714 = vsel %vm712, %v703, %v705
  %v715 = vsel %vm712, %v707, %v709
  %v716 = vsel %vm712, %v709, %v711
  %723 = vrot.lane.b32.xlu0 %v458, 102
  %v724 = vpop.permute.xlu0 %723
  %725 = vrot.lane.b32.xlu0 %v459, 102
  %v726 = vpop.permute.xlu0 %725
  %727 = vrot.lane.b32.xlu0 %v460, 102
  %v728 = vpop.permute.xlu0 %727
  %729 = vrot.lane.b32.xlu0 %v461, 102
  %v730 = vpop.permute.xlu0 %729
  %731 = vrot.lane.b32.xlu0 %v462, 102
  %v732 = vpop.permute.xlu0 %731
  %733 = vrot.lane.b32.xlu0 %v463, 102
  %v734 = vpop.permute.xlu0 %733
  %vm735 = vcmask 834560
  %v736 = vsel %vm735, %v724, %v726
  %v737 = vsel %vm735, %v726, %v728
  %v738 = vsel %vm735, %v730, %v732
  %v739 = vsel %vm735, %v732, %v734
  %746 = vrot.lane.b32.xlu0 %v458, 101
  %v747 = vpop.permute.xlu0 %746
  %748 = vrot.lane.b32.xlu0 %v459, 101
  %v749 = vpop.permute.xlu0 %748
  %750 = vrot.lane.b32.xlu0 %v460, 101
  %v751 = vpop.permute.xlu0 %750
  %752 = vrot.lane.b32.xlu0 %v461, 101
  %v753 = vpop.permute.xlu0 %752
  %754 = vrot.lane.b32.xlu0 %v462, 101
  %v755 = vpop.permute.xlu0 %754
  %756 = vrot.lane.b32.xlu0 %v463, 101
  %v757 = vpop.permute.xlu0 %756
  %vm758 = vcmask 826368
  %v759 = vsel %vm758, %v747, %v749
  %v760 = vsel %vm758, %v749, %v751
  %v761 = vsel %vm758, %v753, %v755
  %v762 = vsel %vm758, %v755, %v757
  %769 = vrot.lane.b32.xlu0 %v458, 100
  %v770 = vpop.permute.xlu0 %769
  %771 = vrot.lane.b32.xlu0 %v459, 100
  %v772 = vpop.permute.xlu0 %771
  %773 = vrot.lane.b32.xlu0 %v460, 100
  %v774 = vpop.permute.xlu0 %773
  %775 = vrot.lane.b32.xlu0 %v461, 100
  %v776 = vpop.permute.xlu0 %775
  %777 = vrot.lane.b32.xlu0 %v462, 100
  %v778 = vpop.permute.xlu0 %777
  %779 = vrot.lane.b32.xlu0 %v463, 100
  %v780 = vpop.permute.xlu0 %779
  %vm781 = vcmask 818176
  %v782 = vsel %vm781, %v770, %v772
  %v783 = vsel %vm781, %v772, %v774
  %v784 = vsel %vm781, %v776, %v778
  %v785 = vsel %vm781, %v778, %v780
  %792 = vrot.lane.b32.xlu0 %v458, 92
  %v793 = vpop.permute.xlu0 %792
  %794 = vrot.lane.b32.xlu0 %v459, 92
  %v795 = vpop.permute.xlu0 %794
  %796 = vrot.lane.b32.xlu0 %v460, 92
  %v797 = vpop.permute.xlu0 %796
  %798 = vrot.lane.b32.xlu0 %v461, 92
  %v799 = vpop.permute.xlu0 %798
  %800 = vrot.lane.b32.xlu0 %v462, 92
  %v801 = vpop.permute.xlu0 %800
  %802 = vrot.lane.b32.xlu0 %v463, 92
  %v803 = vpop.permute.xlu0 %802
  %vm804 = vcmask 752640
  %v805 = vsel %vm804, %v793, %v795
  %v806 = vsel %vm804, %v795, %v797
  %v807 = vsel %vm804, %v799, %v801
  %v808 = vsel %vm804, %v801, %v803
  %815 = vrot.lane.b32.xlu0 %v458, 117
  %v816 = vpop.permute.xlu0 %815
  %817 = vrot.lane.b32.xlu0 %v459, 117
  %v818 = vpop.permute.xlu0 %817
  %819 = vrot.lane.b32.xlu0 %v460, 117
  %v820 = vpop.permute.xlu0 %819
  %821 = vrot.lane.b32.xlu0 %v461, 117
  %v822 = vpop.permute.xlu0 %821
  %823 = vrot.lane.b32.xlu0 %v462, 117
  %v824 = vpop.permute.xlu0 %823
  %825 = vrot.lane.b32.xlu0 %v463, 117
  %v826 = vpop.permute.xlu0 %825
  %vm827 = vcmask 957440
  %v828 = vsel %vm827, %v816, %v818
  %v829 = vsel %vm827, %v818, %v820
  %v830 = vsel %vm827, %v822, %v824
  %v831 = vsel %vm827, %v824, %v826
  %832 = vrot.lane.b32.xlu0 %v458, 91
  %v833 = vpop.permute.xlu0 %832
  %834 = vrot.lane.b32.xlu0 %v459, 91
  %v835 = vpop.permute.xlu0 %834
  %836 = vrot.lane.b32.xlu0 %v460, 91
  %v837 = vpop.permute.xlu0 %836
  %838 = vrot.lane.b32.xlu0 %v461, 91
  %v839 = vpop.permute.xlu0 %838
  %840 = vrot.lane.b32.xlu0 %v462, 91
  %v841 = vpop.permute.xlu0 %840
  %842 = vrot.lane.b32.xlu0 %v463, 91
  %v843 = vpop.permute.xlu0 %842
  %844 = vrot.lane.b32.xlu0 %v483, 91
  %v845 = vpop.permute.xlu0 %844
  %846 = vrot.lane.b32.xlu0 %v484, 91
  %v847 = vpop.permute.xlu0 %846
  %848 = vrot.lane.b32.xlu0 %v475, 91
  %v849 = vpop.permute.xlu0 %848
  %850 = vrot.lane.b32.xlu0 %v485, 91
  %v851 = vpop.permute.xlu0 %850
  %852 = vrot.lane.b32.xlu0 %v486, 91
  %v853 = vpop.permute.xlu0 %852
  %854 = vrot.lane.b32.xlu0 %v481, 91
  %v855 = vpop.permute.xlu0 %854
  %856 = vrot.lane.b32.xlu0 %v506, 91
  %v857 = vpop.permute.xlu0 %856
  %858 = vrot.lane.b32.xlu0 %v507, 91
  %v859 = vpop.permute.xlu0 %858
  %860 = vrot.lane.b32.xlu0 %v498, 91
  %v861 = vpop.permute.xlu0 %860
  %862 = vrot.lane.b32.xlu0 %v508, 91
  %v863 = vpop.permute.xlu0 %862
  %864 = vrot.lane.b32.xlu0 %v509, 91
  %v865 = vpop.permute.xlu0 %864
  %866 = vrot.lane.b32.xlu0 %v504, 91
  %v867 = vpop.permute.xlu0 %866
  %868 = vrot.lane.b32.xlu0 %v529, 91
  %v869 = vpop.permute.xlu0 %868
  %870 = vrot.lane.b32.xlu0 %v530, 91
  %v871 = vpop.permute.xlu0 %870
  %872 = vrot.lane.b32.xlu0 %v521, 91
  %v873 = vpop.permute.xlu0 %872
  %874 = vrot.lane.b32.xlu0 %v531, 91
  %v875 = vpop.permute.xlu0 %874
  %876 = vrot.lane.b32.xlu0 %v532, 91
  %v877 = vpop.permute.xlu0 %876
  %878 = vrot.lane.b32.xlu0 %v527, 91
  %v879 = vpop.permute.xlu0 %878
  %880 = vrot.lane.b32.xlu0 %v828, 91
  %v881 = vpop.permute.xlu0 %880
  %882 = vrot.lane.b32.xlu0 %v829, 91
  %v883 = vpop.permute.xlu0 %882
  %884 = vrot.lane.b32.xlu0 %v820, 91
  %v885 = vpop.permute.xlu0 %884
  %886 = vrot.lane.b32.xlu0 %v830, 91
  %v887 = vpop.permute.xlu0 %886
  %888 = vrot.lane.b32.xlu0 %v831, 91
  %v889 = vpop.permute.xlu0 %888
  %890 = vrot.lane.b32.xlu0 %v826, 91
  %v891 = vpop.permute.xlu0 %890
  %892 = vrot.lane.b32.xlu0 %v575, 91
  %v893 = vpop.permute.xlu0 %892
  %894 = vrot.lane.b32.xlu0 %v576, 91
  %v895 = vpop.permute.xlu0 %894
  %896 = vrot.lane.b32.xlu0 %v567, 91
  %v897 = vpop.permute.xlu0 %896
  %898 = vrot.lane.b32.xlu0 %v577, 91
  %v899 = vpop.permute.xlu0 %898
  %900 = vrot.lane.b32.xlu0 %v578, 91
  %v901 = vpop.permute.xlu0 %900
  %902 = vrot.lane.b32.xlu0 %v573, 91
  %v903 = vpop.permute.xlu0 %902
  %904 = vrot.lane.b32.xlu0 %v598, 91
  %v905 = vpop.permute.xlu0 %904
  %906 = vrot.lane.b32.xlu0 %v599, 91
  %v907 = vpop.permute.xlu0 %906
  %908 = vrot.lane.b32.xlu0 %v590, 91
  %v909 = vpop.permute.xlu0 %908
  %910 = vrot.lane.b32.xlu0 %v600, 91
  %v911 = vpop.permute.xlu0 %910
  %912 = vrot.lane.b32.xlu0 %v601, 91
  %v913 = vpop.permute.xlu0 %912
  %914 = vrot.lane.b32.xlu0 %v596, 91
  %v915 = vpop.permute.xlu0 %914
  %916 = vrot.lane.b32.xlu0 %v621, 91
  %v917 = vpop.permute.xlu0 %916
  %918 = vrot.lane.b32.xlu0 %v622, 91
  %v919 = vpop.permute.xlu0 %918
  %920 = vrot.lane.b32.xlu0 %v613, 91
  %v921 = vpop.permute.xlu0 %920
  %922 = vrot.lane.b32.xlu0 %v623, 91
  %v923 = vpop.permute.xlu0 %922
  %924 = vrot.lane.b32.xlu0 %v624, 91
  %v925 = vpop.permute.xlu0 %924
  %926 = vrot.lane.b32.xlu0 %v619, 91
  %v927 = vpop.permute.xlu0 %926
  %928 = vrot.lane.b32.xlu0 %v644, 91
  %v929 = vpop.permute.xlu0 %928
  %930 = vrot.lane.b32.xlu0 %v645, 91
  %v931 = vpop.permute.xlu0 %930
  %932 = vrot.lane.b32.xlu0 %v636, 91
  %v933 = vpop.permute.xlu0 %932
  %934 = vrot.lane.b32.xlu0 %v646, 91
  %v935 = vpop.permute.xlu0 %934
  %936 = vrot.lane.b32.xlu0 %v647, 91
  %v937 = vpop.permute.xlu0 %936
  %938 = vrot.lane.b32.xlu0 %v642, 91
  %v939 = vpop.permute.xlu0 %938
  %vm940 = vcmask 744448
  %v941 = vsel %vm940, %v833, %v835
  %v942 = vsel %vm940, %v835, %v837
  %v943 = vsel %vm940, %v839, %v841
  %v944 = vsel %vm940, %v841, %v843
  %v945 = vsel %vm940, %v845, %v847
  %v946 = vsel %vm940, %v847, %v849
  %v947 = vsel %vm940, %v851, %v853
  %v948 = vsel %vm940, %v853, %v855
  %v949 = vsel %vm940, %v857, %v859
  %v950 = vsel %vm940, %v859, %v861
  %v951 = vsel %vm940, %v863, %v865
  %v952 = vsel %vm940, %v865, %v867
  %v953 = vsel %vm940, %v869, %v871
  %v954 = vsel %vm940, %v871, %v873
  %v955 = vsel %vm940, %v875, %v877
  %v956 = vsel %vm940, %v877, %v879
  %v957 = vsel %vm940, %v881, %v883
  %v958 = vsel %vm940, %v883, %v885
  %v959 = vsel %vm940, %v887, %v889
  %v960 = vsel %vm940, %v889, %v891
  %v961 = vsel %vm940, %v893, %v895
  %v962 = vsel %vm940, %v895, %v897
  %v963 = vsel %vm940, %v899, %v901
  %v964 = vsel %vm940, %v901, %v903
  %v965 = vsel %vm940, %v905, %v907
  %v966 = vsel %vm940, %v907, %v909
  %v967 = vsel %vm940, %v911, %v913
  %v968 = vsel %vm940, %v913, %v915
  %v969 = vsel %vm940, %v917, %v919
  %v970 = vsel %vm940, %v919, %v921
  %v971 = vsel %vm940, %v923, %v925
  %v972 = vsel %vm940, %v925, %v927
  %v973 = vsel %vm940, %v929, %v931
  %v974 = vsel %vm940, %v931, %v933
  %v975 = vsel %vm940, %v935, %v937
  %v976 = vsel %vm940, %v937, %v939
  %v1031 = vld [vmem:[%s3] sm:$0xff]
  %v1032 = vld [vmem:[%s3 + $0x8] sm:$0xff]
  %v1033 = vld [vmem:[%s3 + $0x10] sm:$0xff]
  %v1034 = vld [vmem:[%s3 + $0x18] sm:$0xff]
  %v1035 = vld [vmem:[%s3 + $0x20] sm:$0xff]
  %v1036 = vld [vmem:[%s3 + $0x28] sm:$0xff]
  %v1037 = vld [vmem:[%s3 + $0x30] sm:$0xff]
  %v1038 = vld [vmem:[%s3 + $0x38] sm:$0xff]
  %v1039 = vld [vmem:[%s3 + $0x40] sm:$0xff]
  %v1040 = vld [vmem:[%s3 + $0x48] sm:$0xff]
  %v1041 = vld [vmem:[%s3 + $0x50] sm:$0xff]
  %v1042 = vld [vmem:[%s3 + $0x58] sm:$0xff]
  %v1043 = vld [vmem:[%s4] sm:$0xff]
  %v1044 = vld [vmem:[%s4 + $0x8] sm:$0xff]
  %v1045 = vld [vmem:[%s4 + $0x10] sm:$0xff]
  %1047 = vset.pattern.permute.xlu0 0
  %1048 = vperm.xlu0 %1047, %v1043
  %v1049 = vpop.permute.xlu0 %1048
  %1052 = vset.pattern.permute.xlu0 0
  %1053 = vperm.xlu0 %1052, %v1044
  %v1054 = vpop.permute.xlu0 %1053
  %1057 = vset.pattern.permute.xlu0 0
  %1058 = vperm.xlu0 %1057, %v1045
  %v1059 = vpop.permute.xlu0 %1058
  %vm1061 = vcmask 130048
  %v1063 = vsel %vm1061, %v1034, 0
  %v1066 = vsel %vm1061, %v1038, 0
  %v1069 = vsel %vm1061, %v1042, 0
  %1071 = vmatpush.msra.mxu0 %v623
  %1072 = vmatpush.msra.mxu0 %v621
  %1073 = vmatpush.msra.mxu0 %v600
  %1074 = vmatpush.msra.mxu0 %v598
  %1075 = vmatpush.msra.mxu0 %v577
  %1076 = vmatpush.msra.mxu0 %v575
  %1077 = vmatpush.msra.mxu0 %v554
  %1078 = vmatpush.msra.mxu0 %v552
  %1079 = vmatpush.msra.mxu0 %v531
  %1080 = vmatpush.msra.mxu0 %v529
  %1081 = vmatpush.msra.mxu0 %v508
  %1082 = vmatpush.msra.mxu0 %v506
  %1083 = vmatpush.msra.mxu0 %v485
  %1084 = vmatpush.msra.mxu0 %v483
  %1085 = vmatpush.msra.mxu0 %v461
  %1086 = vmatpush.msra.mxu0 %v458
  %1087 = vmatmul.f32.gmra.mxu0 %v1031
  %v1088 = vpop.f32.mrf.mxu0
  %v1089 = vadd.f32 %v1049, %v1088
  %1090 = vmatmul.f32.gmra.mxu0 %v1035
  %v1091 = vpop.f32.mrf.mxu0
  %v1092 = vadd.f32 %v1054, %v1091
  %1093 = vmatmul.f32.gmra.mxu0 %v1039
  %v1094 = vpop.f32.mrf.mxu0
  %v1095 = vadd.f32 %v1059, %v1094
  %1096 = vdwg.mxu0
  %1097 = vmatpush.msra.mxu0 %v807
  %1098 = vmatpush.msra.mxu0 %v805
  %1099 = vmatpush.msra.mxu0 %v784
  %1100 = vmatpush.msra.mxu0 %v782
  %1101 = vmatpush.msra.mxu0 %v761
  %1102 = vmatpush.msra.mxu0 %v759
  %1103 = vmatpush.msra.mxu0 %v738
  %1104 = vmatpush.msra.mxu0 %v736
  %1105 = vmatpush.msra.mxu0 %v715
  %1106 = vmatpush.msra.mxu0 %v713
  %1107 = vmatpush.msra.mxu0 %v692
  %1108 = vmatpush.msra.mxu0 %v690
  %1109 = vmatpush.msra.mxu0 %v669
  %1110 = vmatpush.msra.mxu0 %v667
  %1111 = vmatpush.msra.mxu0 %v646
  %1112 = vmatpush.msra.mxu0 %v644
  %1113 = vmatmul.f32.gmra.mxu0 %v1032
  %v1114 = vpop.f32.mrf.mxu0
  %v1115 = vadd.f32 %v1089, %v1114
  %1116 = vmatmul.f32.gmra.mxu0 %v1036
  %v1117 = vpop.f32.mrf.mxu0
  %v1118 = vadd.f32 %v1092, %v1117
  %1119 = vmatmul.f32.gmra.mxu0 %v1040
  %v1120 = vpop.f32.mrf.mxu0
  %v1121 = vadd.f32 %v1095, %v1120
  %1122 = vdwg.mxu0
  %1123 = vmatpush.msra.mxu0 %v971
  %1124 = vmatpush.msra.mxu0 %v969
  %1125 = vmatpush.msra.mxu0 %v967
  %1126 = vmatpush.msra.mxu0 %v965
  %1127 = vmatpush.msra.mxu0 %v963
  %1128 = vmatpush.msra.mxu0 %v961
  %1129 = vmatpush.msra.mxu0 %v959
  %1130 = vmatpush.msra.mxu0 %v957
  %1131 = vmatpush.msra.mxu0 %v955
  %1132 = vmatpush.msra.mxu0 %v953
  %1133 = vmatpush.msra.mxu0 %v951
  %1134 = vmatpush.msra.mxu0 %v949
  %1135 = vmatpush.msra.mxu0 %v947
  %1136 = vmatpush.msra.mxu0 %v945
  %1137 = vmatpush.msra.mxu0 %v943
  %1138 = vmatpush.msra.mxu0 %v941
  %1139 = vmatmul.f32.gmra.mxu0 %v1033
  %v1140 = vpop.f32.mrf.mxu0
  %v1141 = vadd.f32 %v1115, %v1140
  %1142 = vmatmul.f32.gmra.mxu0 %v1037
  %v1143 = vpop.f32.mrf.mxu0
  %v1144 = vadd.f32 %v1118, %v1143
  %1145 = vmatmul.f32.gmra.mxu0 %v1041
  %v1146 = vpop.f32.mrf.mxu0
  %v1147 = vadd.f32 %v1121, %v1146
  %1148 = vdwg.mxu0
  %1149 = vmatpush.msra.mxu0 0.0
  %1150 = vmatpush.msra.mxu0 0.0
  %1151 = vmatpush.msra.mxu0 0.0
  %1152 = vmatpush.msra.mxu0 0.0
  %1153 = vmatpush.msra.mxu0 0.0
  %1154 = vmatpush.msra.mxu0 0.0
  %1155 = vmatpush.msra.mxu0 0.0
  %1156 = vmatpush.msra.mxu0 0.0
  %1157 = vmatpush.msra.mxu0 0.0
  %1158 = vmatpush.msra.mxu0 0.0
  %1159 = vmatpush.msra.mxu0 0.0
  %1160 = vmatpush.msra.mxu0 0.0
  %1161 = vmatpush.msra.mxu0 0.0
  %1162 = vmatpush.msra.mxu0 0.0
  %1163 = vmatpush.msra.mxu0 %v975
  %1164 = vmatpush.msra.mxu0 %v973
  %1165 = vmatmul.f32.gmra.mxu0 %v1063
  %v1166 = vpop.f32.mrf.mxu0
  %v1167 = vadd.f32 %v1141, %v1166
  %1168 = vmatmul.f32.gmra.mxu0 %v1066
  %v1169 = vpop.f32.mrf.mxu0
  %v1170 = vadd.f32 %v1144, %v1169
  %1171 = vmatmul.f32.gmra.mxu0 %v1069
  %v1172 = vpop.f32.mrf.mxu0
  %v1173 = vadd.f32 %v1147, %v1172
  %1174 = vdwg.mxu0
  %1175 = vmatpush.msra.mxu0 %v624
  %1176 = vmatpush.msra.mxu0 %v622
  %1177 = vmatpush.msra.mxu0 %v601
  %1178 = vmatpush.msra.mxu0 %v599
  %1179 = vmatpush.msra.mxu0 %v578
  %1180 = vmatpush.msra.mxu0 %v576
  %1181 = vmatpush.msra.mxu0 %v555
  %1182 = vmatpush.msra.mxu0 %v553
  %1183 = vmatpush.msra.mxu0 %v532
  %1184 = vmatpush.msra.mxu0 %v530
  %1185 = vmatpush.msra.mxu0 %v509
  %1186 = vmatpush.msra.mxu0 %v507
  %1187 = vmatpush.msra.mxu0 %v486
  %1188 = vmatpush.msra.mxu0 %v484
  %1189 = vmatpush.msra.mxu0 %v462
  %1190 = vmatpush.msra.mxu0 %v459
  %1191 = vmatmul.f32.gmra.mxu0 %v1031
  %v1192 = vpop.f32.mrf.mxu0
  %v1193 = vadd.f32 %v1049, %v1192
  %1194 = vmatmul.f32.gmra.mxu0 %v1035
  %v1195 = vpop.f32.mrf.mxu0
  %v1196 = vadd.f32 %v1054, %v1195
  %1197 = vmatmul.f32.gmra.mxu0 %v1039
  %v1198 = vpop.f32.mrf.mxu0
  %v1199 = vadd.f32 %v1059, %v1198
  %1200 = vdwg.mxu0
  %1201 = vmatpush.msra.mxu0 %v808
  %1202 = vmatpush.msra.mxu0 %v806
  %1203 = vmatpush.msra.mxu0 %v785
  %1204 = vmatpush.msra.mxu0 %v783
  %1205 = vmatpush.msra.mxu0 %v762
  %1206 = vmatpush.msra.mxu0 %v760
  %1207 = vmatpush.msra.mxu0 %v739
  %1208 = vmatpush.msra.mxu0 %v737
  %1209 = vmatpush.msra.mxu0 %v716
  %1210 = vmatpush.msra.mxu0 %v714
  %1211 = vmatpush.msra.mxu0 %v693
  %1212 = vmatpush.msra.mxu0 %v691
  %1213 = vmatpush.msra.mxu0 %v670
  %1214 = vmatpush.msra.mxu0 %v668
  %1215 = vmatpush.msra.mxu0 %v647
  %1216 = vmatpush.msra.mxu0 %v645
  %1217 = vmatmul.f32.gmra.mxu0 %v1032
  %v1218 = vpop.f32.mrf.mxu0
  %v1219 = vadd.f32 %v1193, %v1218
  %1220 = vmatmul.f32.gmra.mxu0 %v1036
  %v1221 = vpop.f32.mrf.mxu0
  %v1222 = vadd.f32 %v1196, %v1221
  %1223 = vmatmul.f32.gmra.mxu0 %v1040
  %v1224 = vpop.f32.mrf.mxu0
  %v1225 = vadd.f32 %v1199, %v1224
  %1226 = vdwg.mxu0
  %1227 = vmatpush.msra.mxu0 %v972
  %1228 = vmatpush.msra.mxu0 %v970
  %1229 = vmatpush.msra.mxu0 %v968
  %1230 = vmatpush.msra.mxu0 %v966
  %1231 = vmatpush.msra.mxu0 %v964
  %1232 = vmatpush.msra.mxu0 %v962
  %1233 = vmatpush.msra.mxu0 %v960
  %1234 = vmatpush.msra.mxu0 %v958
  %1235 = vmatpush.msra.mxu0 %v956
  %1236 = vmatpush.msra.mxu0 %v954
  %1237 = vmatpush.msra.mxu0 %v952
  %1238 = vmatpush.msra.mxu0 %v950
  %1239 = vmatpush.msra.mxu0 %v948
  %1240 = vmatpush.msra.mxu0 %v946
  %1241 = vmatpush.msra.mxu0 %v944
  %1242 = vmatpush.msra.mxu0 %v942
  %1243 = vmatmul.f32.gmra.mxu0 %v1033
  %v1244 = vpop.f32.mrf.mxu0
  %v1245 = vadd.f32 %v1219, %v1244
  %1246 = vmatmul.f32.gmra.mxu0 %v1037
  %v1247 = vpop.f32.mrf.mxu0
  %v1248 = vadd.f32 %v1222, %v1247
  %1249 = vmatmul.f32.gmra.mxu0 %v1041
  %v1250 = vpop.f32.mrf.mxu0
  %v1251 = vadd.f32 %v1225, %v1250
  %1252 = vdwg.mxu0
  %1253 = vmatpush.msra.mxu0 0.0
  %1254 = vmatpush.msra.mxu0 0.0
  %1255 = vmatpush.msra.mxu0 0.0
  %1256 = vmatpush.msra.mxu0 0.0
  %1257 = vmatpush.msra.mxu0 0.0
  %1258 = vmatpush.msra.mxu0 0.0
  %1259 = vmatpush.msra.mxu0 0.0
  %1260 = vmatpush.msra.mxu0 0.0
  %1261 = vmatpush.msra.mxu0 0.0
  %1262 = vmatpush.msra.mxu0 0.0
  %1263 = vmatpush.msra.mxu0 0.0
  %1264 = vmatpush.msra.mxu0 0.0
  %1265 = vmatpush.msra.mxu0 0.0
  %1266 = vmatpush.msra.mxu0 0.0
  %1267 = vmatpush.msra.mxu0 %v976
  %1268 = vmatpush.msra.mxu0 %v974
  %1269 = vmatmul.f32.gmra.mxu0 %v1063
  %v1270 = vpop.f32.mrf.mxu0
  %v1271 = vadd.f32 %v1245, %v1270
  %1272 = vmatmul.f32.gmra.mxu0 %v1066
  %v1273 = vpop.f32.mrf.mxu0
  %v1274 = vadd.f32 %v1248, %v1273
  %1275 = vmatmul.f32.gmra.mxu0 %v1069
  %v1276 = vpop.f32.mrf.mxu0
  %v1277 = vadd.f32 %v1251, %v1276
  %1278 = vdwg.mxu0
  %1279 = vmatpush.msra.mxu0 %v619
  %1280 = vmatpush.msra.mxu0 %v613
  %1281 = vmatpush.msra.mxu0 %v596
  %1282 = vmatpush.msra.mxu0 %v590
  %1283 = vmatpush.msra.mxu0 %v573
  %1284 = vmatpush.msra.mxu0 %v567
  %1285 = vmatpush.msra.mxu0 %v550
  %1286 = vmatpush.msra.mxu0 %v544
  %1287 = vmatpush.msra.mxu0 %v527
  %1288 = vmatpush.msra.mxu0 %v521
  %1289 = vmatpush.msra.mxu0 %v504
  %1290 = vmatpush.msra.mxu0 %v498
  %1291 = vmatpush.msra.mxu0 %v481
  %1292 = vmatpush.msra.mxu0 %v475
  %1293 = vmatpush.msra.mxu0 %v463
  %1294 = vmatpush.msra.mxu0 %v460
  %1295 = vmatmul.f32.gmra.mxu0 %v1031
  %v1296 = vpop.f32.mrf.mxu0
  %v1297 = vadd.f32 %v1049, %v1296
  %1298 = vmatmul.f32.gmra.mxu0 %v1035
  %v1299 = vpop.f32.mrf.mxu0
  %v1300 = vadd.f32 %v1054, %v1299
  %1301 = vmatmul.f32.gmra.mxu0 %v1039
  %v1302 = vpop.f32.mrf.mxu0
  %v1303 = vadd.f32 %v1059, %v1302
  %1304 = vdwg.mxu0
  %1305 = vmatpush.msra.mxu0 %v803
  %1306 = vmatpush.msra.mxu0 %v797
  %1307 = vmatpush.msra.mxu0 %v780
  %1308 = vmatpush.msra.mxu0 %v774
  %1309 = vmatpush.msra.mxu0 %v757
  %1310 = vmatpush.msra.mxu0 %v751
  %1311 = vmatpush.msra.mxu0 %v734
  %1312 = vmatpush.msra.mxu0 %v728
  %1313 = vmatpush.msra.mxu0 %v711
  %1314 = vmatpush.msra.mxu0 %v705
  %1315 = vmatpush.msra.mxu0 %v688
  %1316 = vmatpush.msra.mxu0 %v682
  %1317 = vmatpush.msra.mxu0 %v665
  %1318 = vmatpush.msra.mxu0 %v659
  %1319 = vmatpush.msra.mxu0 %v642
  %1320 = vmatpush.msra.mxu0 %v636
  %1321 = vmatmul.f32.gmra.mxu0 %v1032
  %v1322 = vpop.f32.mrf.mxu0
  %v1323 = vadd.f32 %v1297, %v1322
  %1324 = vmatmul.f32.gmra.mxu0 %v1036
  %v1325 = vpop.f32.mrf.mxu0
  %v1326 = vadd.f32 %v1300, %v1325
  %1327 = vmatmul.f32.gmra.mxu0 %v1040
  %v1328 = vpop.f32.mrf.mxu0
  %v1329 = vadd.f32 %v1303, %v1328
  %1330 = vdwg.mxu0
  %1331 = vmatpush.msra.mxu0 %v927
  %1332 = vmatpush.msra.mxu0 %v921
  %1333 = vmatpush.msra.mxu0 %v915
  %1334 = vmatpush.msra.mxu0 %v909
  %1335 = vmatpush.msra.mxu0 %v903
  %1336 = vmatpush.msra.mxu0 %v897
  %1337 = vmatpush.msra.mxu0 %v891
  %1338 = vmatpush.msra.mxu0 %v885
  %1339 = vmatpush.msra.mxu0 %v879
  %1340 = vmatpush.msra.mxu0 %v873
  %1341 = vmatpush.msra.mxu0 %v867
  %1342 = vmatpush.msra.mxu0 %v861
  %1343 = vmatpush.msra.mxu0 %v855
  %1344 = vmatpush.msra.mxu0 %v849
  %1345 = vmatpush.msra.mxu0 %v843
  %1346 = vmatpush.msra.mxu0 %v837
  %1347 = vmatmul.f32.gmra.mxu0 %v1033
  %v1348 = vpop.f32.mrf.mxu0
  %v1349 = vadd.f32 %v1323, %v1348
  %1350 = vmatmul.f32.gmra.mxu0 %v1037
  %v1351 = vpop.f32.mrf.mxu0
  %v1352 = vadd.f32 %v1326, %v1351
  %1353 = vmatmul.f32.gmra.mxu0 %v1041
  %v1354 = vpop.f32.mrf.mxu0
  %v1355 = vadd.f32 %v1329, %v1354
  %1356 = vdwg.mxu0
  %1357 = vmatpush.msra.mxu0 0.0
  %1358 = vmatpush.msra.mxu0 0.0
  %1359 = vmatpush.msra.mxu0 0.0
  %1360 = vmatpush.msra.mxu0 0.0
  %1361 = vmatpush.msra.mxu0 0.0
  %1362 = vmatpush.msra.mxu0 0.0
  %1363 = vmatpush.msra.mxu0 0.0
  %1364 = vmatpush.msra.mxu0 0.0
  %1365 = vmatpush.msra.mxu0 0.0
  %1366 = vmatpush.msra.mxu0 0.0
  %1367 = vmatpush.msra.mxu0 0.0
  %1368 = vmatpush.msra.mxu0 0.0
  %1369 = vmatpush.msra.mxu0 0.0
  %1370 = vmatpush.msra.mxu0 0.0
  %1371 = vmatpush.msra.mxu0 %v939
  %1372 = vmatpush.msra.mxu0 %v933
  %1373 = vmatmul.f32.gmra.mxu0 %v1063
  %v1374 = vpop.f32.mrf.mxu0
  %v1375 = vadd.f32 %v1349, %v1374
  %1376 = vmatmul.f32.gmra.mxu0 %v1066
  %v1377 = vpop.f32.mrf.mxu0
  %v1378 = vadd.f32 %v1352, %v1377
  %1379 = vmatmul.f32.gmra.mxu0 %v1069
  %v1380 = vpop.f32.mrf.mxu0
  %v1381 = vadd.f32 %v1355, %v1380
  %1382 = vdwg.mxu0
  %1392 = vrot.lane.b32.xlu0 %v1167, 127
  %v1393 = vpop.permute.xlu0 %1392
  %1394 = vrot.lane.b32.xlu0 %v1271, 127
  %v1395 = vpop.permute.xlu0 %1394
  %1396 = vrot.lane.b32.xlu0 %v1375, 127
  %v1397 = vpop.permute.xlu0 %1396
  %1398 = vrot.lane.b32.xlu0 %v1170, 127
  %v1399 = vpop.permute.xlu0 %1398
  %1400 = vrot.lane.b32.xlu0 %v1274, 127
  %v1401 = vpop.permute.xlu0 %1400
  %1402 = vrot.lane.b32.xlu0 %v1378, 127
  %v1403 = vpop.permute.xlu0 %1402
  %1404 = vrot.lane.b32.xlu0 %v1173, 127
  %v1405 = vpop.permute.xlu0 %1404
  %1406 = vrot.lane.b32.xlu0 %v1277, 127
  %v1407 = vpop.permute.xlu0 %1406
  %1408 = vrot.lane.b32.xlu0 %v1381, 127
  %v1409 = vpop.permute.xlu0 %1408
  %v1410 = vsel %vm482, %v1393, %v1395
  %v1411 = vsel %vm482, %v1395, %v1397
  %v1412 = vsel %vm482, %v1399, %v1401
  %v1413 = vsel %vm482, %v1401, %v1403
  %v1414 = vsel %vm482, %v1405, %v1407
  %v1415 = vsel %vm482, %v1407, %v1409
  %v1425 = vmax.f32 %v1167, %v1410
  %v1426 = vmax.f32 %v1271, %v1411
  %v1427 = vmax.f32 %v1375, %v1397
  %v1428 = vmax.f32 %v1170, %v1412
  %v1429 = vmax.f32 %v1274, %v1413
  %v1430 = vmax.f32 %v1378, %v1403
  %v1431 = vmax.f32 %v1173, %v1414
  %v1432 = vmax.f32 %v1277, %v1415
  %v1433 = vmax.f32 %v1381, %v1409
  %1443 = vrot.lane.b32.xlu0 %v1425, 116
  %v1444 = vpop.permute.xlu0 %1443
  %1445 = vrot.lane.b32.xlu0 %v1426, 116
  %v1446 = vpop.permute.xlu0 %1445
  %1447 = vrot.lane.b32.xlu0 %v1427, 116
  %v1448 = vpop.permute.xlu0 %1447
  %1449 = vrot.lane.b32.xlu0 %v1428, 116
  %v1450 = vpop.permute.xlu0 %1449
  %1451 = vrot.lane.b32.xlu0 %v1429, 116
  %v1452 = vpop.permute.xlu0 %1451
  %1453 = vrot.lane.b32.xlu0 %v1430, 116
  %v1454 = vpop.permute.xlu0 %1453
  %1455 = vrot.lane.b32.xlu0 %v1431, 116
  %v1456 = vpop.permute.xlu0 %1455
  %1457 = vrot.lane.b32.xlu0 %v1432, 116
  %v1458 = vpop.permute.xlu0 %1457
  %1459 = vrot.lane.b32.xlu0 %v1433, 116
  %v1460 = vpop.permute.xlu0 %1459
  %v1461 = vsel %vm574, %v1444, %v1446
  %v1462 = vsel %vm574, %v1446, %v1448
  %v1463 = vsel %vm574, %v1450, %v1452
  %v1464 = vsel %vm574, %v1452, %v1454
  %v1465 = vsel %vm574, %v1456, %v1458
  %v1466 = vsel %vm574, %v1458, %v1460
  %v1476 = vmax.f32 %v1425, %v1461
  %v1477 = vmax.f32 %v1426, %v1462
  %v1478 = vmax.f32 %v1427, %v1448
  %v1479 = vmax.f32 %v1428, %v1463
  %v1480 = vmax.f32 %v1429, %v1464
  %v1481 = vmax.f32 %v1430, %v1454
  %v1482 = vmax.f32 %v1431, %v1465
  %v1483 = vmax.f32 %v1432, %v1466
  %v1484 = vmax.f32 %v1433, %v1460
  %v1485 = vmax.f32 %v1476, 0.0
  %v1486 = vmax.f32 %v1477, 0.0
  %v1487 = vmax.f32 %v1478, 0.0
  %v1488 = vmax.f32 %v1479, 0.0
  %v1489 = vmax.f32 %v1480, 0.0
  %v1490 = vmax.f32 %v1481, 0.0
  %v1491 = vmax.f32 %v1482, 0.0
  %v1492 = vmax.f32 %v1483, 0.0
  %v1493 = vmax.f32 %v1484, 0.0
  %v1494 = vld [vmem:[%s5] sm:$0xff]
  %v1495 = vld [vmem:[%s5 + $0x8] sm:$0xff]
  %v1496 = vld [vmem:[%s5 + $0x10] sm:$0xff]
  %v1497 = vld [vmem:[%s5 + $0x18] sm:$0xff]
  %v1498 = vld [vmem:[%s5 + $0x20] sm:$0xff]
  %v1499 = vld [vmem:[%s5 + $0x28] sm:$0xff]
  %v1500 = vld [vmem:[%s5 + $0x30] sm:$0xff]
  %v1501 = vld [vmem:[%s5 + $0x38] sm:$0xff]
  %v1502 = vld [vmem:[%s5 + $0x40] sm:$0xff]
  %v1503 = vld [vmem:[%s5 + $0x48] sm:$0xff]
  %v1504 = vld [vmem:[%s5 + $0x50] sm:$0xff]
  %v1505 = vld [vmem:[%s5 + $0x58] sm:$0xff]
  %v1506 = vld [vmem:[%s5 + $0x60] sm:$0xff]
  %v1507 = vld [vmem:[%s5 + $0x68] sm:$0xff]
  %v1508 = vld [vmem:[%s5 + $0x70] sm:$0xff]
  %v1509 = vld [vmem:[%s5 + $0x78] sm:$0xff]
  %v1510 = vld [vmem:[%s5 + $0x80] sm:$0xff]
  %v1511 = vld [vmem:[%s5 + $0x88] sm:$0xff]
  %v1512 = vld [vmem:[%s5 + $0x90] sm:$0xff]
  %v1513 = vld [vmem:[%s5 + $0x98] sm:$0xff]
  %v1514 = vld [vmem:[%s5 + $0xa0] sm:$0xff]
  %v1515 = vld [vmem:[%s5 + $0xa8] sm:$0xff]
  %v1516 = vld [vmem:[%s5 + $0xb0] sm:$0xff]
  %v1517 = vld [vmem:[%s5 + $0xb8] sm:$0xff]
  %v1518 = vld [vmem:[%s5 + $0xc0] sm:$0xff]
  %v1519 = vld [vmem:[%s5 + $0xc8] sm:$0xff]
  %v1520 = vld [vmem:[%s5 + $0xd0] sm:$0xff]
  %v1521 = vld [vmem:[%s5 + $0xd8] sm:$0xff]
  %v1522 = vld [vmem:[%s5 + $0xe0] sm:$0xff]
  %v1523 = vld [vmem:[%s5 + $0xe8] sm:$0xff]
  %v1524 = vld [vmem:[%s5 + $0xf0] sm:$0xff]
  %v1525 = vld [vmem:[%s5 + $0xf8] sm:$0xff]
  %v1526 = vld [vmem:[%s5 + $0x100] sm:$0xff]
  %v1527 = vld [vmem:[%s5 + $0x108] sm:$0xff]
  %v1528 = vld [vmem:[%s5 + $0x110] sm:$0xff]
  %v1529 = vld [vmem:[%s5 + $0x118] sm:$0xff]
  %v1531 = vsel %vm89, %v1487, 0
  %v1534 = vsel %vm89, %v1490, 0
  %v1537 = vsel %vm89, %v1493, 0
  %1539 = vmatpush.msra.mxu0 %v1509
  %1540 = vmatpush.msra.mxu0 %v1508
  %1541 = vmatpush.msra.mxu0 %v1507
  %1542 = vmatpush.msra.mxu0 %v1506
  %1543 = vmatpush.msra.mxu0 %v1505
  %1544 = vmatpush.msra.mxu0 %v1504
  %1545 = vmatpush.msra.mxu0 %v1503
  %1546 = vmatpush.msra.mxu0 %v1502
  %1547 = vmatpush.msra.mxu0 %v1501
  %1548 = vmatpush.msra.mxu0 %v1500
  %1549 = vmatpush.msra.mxu0 %v1499
  %1550 = vmatpush.msra.mxu0 %v1498
  %1551 = vmatpush.msra.mxu0 %v1497
  %1552 = vmatpush.msra.mxu0 %v1496
  %1553 = vmatpush.msra.mxu0 %v1495
  %1554 = vmatpush.msra.mxu0 %v1494
  %1555 = vmatmul.f32.gmra.mxu0 %v1485
  %v1556 = vpop.f32.mrf.mxu0
  %v1557 = vadd.f32 0.0, %v1556
  %1558 = vmatmul.f32.gmra.mxu0 %v1488
  %v1559 = vpop.f32.mrf.mxu0
  %v1560 = vadd.f32 0.0, %v1559
  %1561 = vmatmul.f32.gmra.mxu0 %v1491
  %v1562 = vpop.f32.mrf.mxu0
  %v1563 = vadd.f32 0.0, %v1562
  %1564 = vdwg.mxu0
  %1565 = vmatpush.msra.mxu0 %v1525
  %1566 = vmatpush.msra.mxu0 %v1524
  %1567 = vmatpush.msra.mxu0 %v1523
  %1568 = vmatpush.msra.mxu0 %v1522
  %1569 = vmatpush.msra.mxu0 %v1521
  %1570 = vmatpush.msra.mxu0 %v1520
  %1571 = vmatpush.msra.mxu0 %v1519
  %1572 = vmatpush.msra.mxu0 %v1518
  %1573 = vmatpush.msra.mxu0 %v1517
  %1574 = vmatpush.msra.mxu0 %v1516
  %1575 = vmatpush.msra.mxu0 %v1515
  %1576 = vmatpush.msra.mxu0 %v1514
  %1577 = vmatpush.msra.mxu0 %v1513
  %1578 = vmatpush.msra.mxu0 %v1512
  %1579 = vmatpush.msra.mxu0 %v1511
  %1580 = vmatpush.msra.mxu0 %v1510
  %1581 = vmatmul.f32.gmra.mxu0 %v1486
  %v1582 = vpop.f32.mrf.mxu0
  %v1583 = vadd.f32 %v1557, %v1582
  %1584 = vmatmul.f32.gmra.mxu0 %v1489
  %v1585 = vpop.f32.mrf.mxu0
  %v1586 = vadd.f32 %v1560, %v1585
  %1587 = vmatmul.f32.gmra.mxu0 %v1492
  %v1588 = vpop.f32.mrf.mxu0
  %v1589 = vadd.f32 %v1563, %v1588
  %1590 = vdwg.mxu0
  %1591 = vmatpush.msra.mxu0 0.0
  %1592 = vmatpush.msra.mxu0 0.0
  %1593 = vmatpush.msra.mxu0 0.0
  %1594 = vmatpush.msra.mxu0 0.0
  %1595 = vmatpush.msra.mxu0 0.0
  %1596 = vmatpush.msra.mxu0 0.0
  %1597 = vmatpush.msra.mxu0 0.0
  %1598 = vmatpush.msra.mxu0 0.0
  %1599 = vmatpush.msra.mxu0 0.0
  %1600 = vmatpush.msra.mxu0 0.0
  %1601 = vmatpush.msra.mxu0 0.0
  %1602 = vmatpush.msra.mxu0 0.0
  %1603 = vmatpush.msra.mxu0 %v1529
  %1604 = vmatpush.msra.mxu0 %v1528
  %1605 = vmatpush.msra.mxu0 %v1527
  %1606 = vmatpush.msra.mxu0 %v1526
  %1607 = vmatmul.f32.gmra.mxu0 %v1531
  %v1608 = vpop.f32.mrf.mxu0
  %v1609 = vadd.f32 %v1583, %v1608
  %1610 = vmatmul.f32.gmra.mxu0 %v1534
  %v1611 = vpop.f32.mrf.mxu0
  %v1612 = vadd.f32 %v1586, %v1611
  %1613 = vmatmul.f32.gmra.mxu0 %v1537
  %v1614 = vpop.f32.mrf.mxu0
  %v1615 = vadd.f32 %v1589, %v1614
  %1616 = vdwg.mxu0
  %1620 = vrot.lane.b32.xlu0 %v1609, 126
  %v1621 = vpop.permute.xlu0 %1620
  %1622 = vrot.lane.b32.xlu0 %v1612, 126
  %v1623 = vpop.permute.xlu0 %1622
  %1624 = vrot.lane.b32.xlu0 %v1615, 126
  %v1625 = vpop.permute.xlu0 %1624
  %1629 = vrot.lane.b32.xlu0 %v1609, 124
  %v1630 = vpop.permute.xlu0 %1629
  %1631 = vrot.lane.b32.xlu0 %v1612, 124
  %v1632 = vpop.permute.xlu0 %1631
  %1633 = vrot.lane.b32.xlu0 %v1615, 124
  %v1634 = vpop.permute.xlu0 %1633
  %1638 = vrot.lane.b32.xlu0 %v1609, 122
  %v1639 = vpop.permute.xlu0 %1638
  %1640 = vrot.lane.b32.xlu0 %v1612, 122
  %v1641 = vpop.permute.xlu0 %1640
  %1642 = vrot.lane.b32.xlu0 %v1615, 122
  %v1643 = vpop.permute.xlu0 %1642
  %1647 = vrot.lane.b32.xlu0 %v1609, 120
  %v1648 = vpop.permute.xlu0 %1647
  %1649 = vrot.lane.b32.xlu0 %v1612, 120
  %v1650 = vpop.permute.xlu0 %1649
  %1651 = vrot.lane.b32.xlu0 %v1615, 120
  %v1652 = vpop.permute.xlu0 %1651
  %1656 = vrot.lane.b32.xlu0 %v1609, 118
  %v1657 = vpop.permute.xlu0 %1656
  %1658 = vrot.lane.b32.xlu0 %v1612, 118
  %v1659 = vpop.permute.xlu0 %1658
  %1660 = vrot.lane.b32.xlu0 %v1615, 118
  %v1661 = vpop.permute.xlu0 %1660
  %1665 = vrot.lane.b32.xlu0 %v1609, 116
  %v1666 = vpop.permute.xlu0 %1665
  %1667 = vrot.lane.b32.xlu0 %v1612, 116
  %v1668 = vpop.permute.xlu0 %1667
  %1669 = vrot.lane.b32.xlu0 %v1615, 116
  %v1670 = vpop.permute.xlu0 %1669
  %1674 = vrot.lane.b32.xlu0 %v1609, 114
  %v1675 = vpop.permute.xlu0 %1674
  %1676 = vrot.lane.b32.xlu0 %v1612, 114
  %v1677 = vpop.permute.xlu0 %1676
  %1678 = vrot.lane.b32.xlu0 %v1615, 114
  %v1679 = vpop.permute.xlu0 %1678
  %1683 = vrot.lane.b32.xlu0 %v1609, 112
  %v1684 = vpop.permute.xlu0 %1683
  %1685 = vrot.lane.b32.xlu0 %v1612, 112
  %v1686 = vpop.permute.xlu0 %1685
  %1687 = vrot.lane.b32.xlu0 %v1615, 112
  %v1688 = vpop.permute.xlu0 %1687
  %1692 = vrot.lane.b32.xlu0 %v1609, 110
  %v1693 = vpop.permute.xlu0 %1692
  %1694 = vrot.lane.b32.xlu0 %v1612, 110
  %v1695 = vpop.permute.xlu0 %1694
  %1696 = vrot.lane.b32.xlu0 %v1615, 110
  %v1697 = vpop.permute.xlu0 %1696
  %1701 = vrot.lane.b32.xlu0 %v1609, 108
  %v1702 = vpop.permute.xlu0 %1701
  %1703 = vrot.lane.b32.xlu0 %v1612, 108
  %v1704 = vpop.permute.xlu0 %1703
  %1705 = vrot.lane.b32.xlu0 %v1615, 108
  %v1706 = vpop.permute.xlu0 %1705
  %1710 = vrot.lane.b32.xlu0 %v1609, 106
  %v1711 = vpop.permute.xlu0 %1710
  %1712 = vrot.lane.b32.xlu0 %v1612, 106
  %v1713 = vpop.permute.xlu0 %1712
  %1714 = vrot.lane.b32.xlu0 %v1615, 106
  %v1715 = vpop.permute.xlu0 %1714
  %1719 = vrot.lane.b32.xlu0 %v1609, 104
  %v1720 = vpop.permute.xlu0 %1719
  %1721 = vrot.lane.b32.xlu0 %v1612, 104
  %v1722 = vpop.permute.xlu0 %1721
  %1723 = vrot.lane.b32.xlu0 %v1615, 104
  %v1724 = vpop.permute.xlu0 %1723
  %1728 = vrot.lane.b32.xlu0 %v1609, 102
  %v1729 = vpop.permute.xlu0 %1728
  %1730 = vrot.lane.b32.xlu0 %v1612, 102
  %v1731 = vpop.permute.xlu0 %1730
  %1732 = vrot.lane.b32.xlu0 %v1615, 102
  %v1733 = vpop.permute.xlu0 %1732
  %1737 = vrot.lane.b32.xlu0 %v1609, 100
  %v1738 = vpop.permute.xlu0 %1737
  %1739 = vrot.lane.b32.xlu0 %v1612, 100
  %v1740 = vpop.permute.xlu0 %1739
  %1741 = vrot.lane.b32.xlu0 %v1615, 100
  %v1742 = vpop.permute.xlu0 %1741
  %1746 = vrot.lane.b32.xlu0 %v1609, 98
  %v1747 = vpop.permute.xlu0 %1746
  %1748 = vrot.lane.b32.xlu0 %v1612, 98
  %v1749 = vpop.permute.xlu0 %1748
  %1750 = vrot.lane.b32.xlu0 %v1615, 98
  %v1751 = vpop.permute.xlu0 %1750
  %v1755 = vld [vmem:[%s6] sm:$0xff]
  %v1756 = vld [vmem:[%s6 + $0x8] sm:$0xff]
  %v1757 = vld [vmem:[%s6 + $0x10] sm:$0xff]
  %v1758 = vld [vmem:[%s6 + $0x18] sm:$0xff]
  %v1759 = vld [vmem:[%s6 + $0x20] sm:$0xff]
  %v1760 = vld [vmem:[%s6 + $0x28] sm:$0xff]
  %v1761 = vld [vmem:[%s6 + $0x30] sm:$0xff]
  %v1762 = vld [vmem:[%s6 + $0x38] sm:$0xff]
  %v1763 = vld [vmem:[%s6 + $0x40] sm:$0xff]
  %v1764 = vld [vmem:[%s6 + $0x48] sm:$0xff]
  %v1765 = vld [vmem:[%s6 + $0x50] sm:$0xff]
  %v1766 = vld [vmem:[%s6 + $0x58] sm:$0xff]
  %v1767 = vld [vmem:[%s6 + $0x60] sm:$0xff]
  %v1768 = vld [vmem:[%s6 + $0x68] sm:$0xff]
  %v1769 = vld [vmem:[%s6 + $0x70] sm:$0xff]
  %v1770 = vld [vmem:[%s6 + $0x78] sm:$0xff]
  %v1771 = vld [vmem:[%s6 + $0x80] sm:$0xff]
  %v1772 = vld [vmem:[%s6 + $0x88] sm:$0xff]
  %v1773 = vld [vmem:[%s6 + $0x90] sm:$0x3]
  %v1774 = vld [vmem:[%s6 + $0x98] sm:$0x3]
  %v1775 = vld [vmem:[%s6 + $0xa0] sm:$0x3]
  %v1776 = vld [vmem:[%s7] sm:$0xff]
  %v1777 = vld [vmem:[%s7 + $0x8] sm:$0xff]
  %v1778 = vld [vmem:[%s7 + $0x10] sm:$0xff]
  %v1779 = vld [vmem:[%s7 + $0x18] sm:$0xff]
  %v1780 = vld [vmem:[%s7 + $0x20] sm:$0xff]
  %v1781 = vld [vmem:[%s7 + $0x28] sm:$0xff]
  %v1782 = vld [vmem:[%s7 + $0x30] sm:$0x3]
  %1784 = vset.pattern.permute.xlu0 0
  %1785 = vperm.xlu0 %1784, %v1776
  %v1786 = vpop.permute.xlu0 %1785
  %1789 = vset.pattern.permute.xlu0 0
  %1790 = vperm.xlu0 %1789, %v1777
  %v1791 = vpop.permute.xlu0 %1790
  %1794 = vset.pattern.permute.xlu0 0
  %1795 = vperm.xlu0 %1794, %v1778
  %v1796 = vpop.permute.xlu0 %1795
  %1799 = vset.pattern.permute.xlu0 0
  %1800 = vperm.xlu0 %1799, %v1779
  %v1801 = vpop.permute.xlu0 %1800
  %1804 = vset.pattern.permute.xlu0 0
  %1805 = vperm.xlu0 %1804, %v1780
  %v1806 = vpop.permute.xlu0 %1805
  %1809 = vset.pattern.permute.xlu0 0
  %1810 = vperm.xlu0 %1809, %v1781
  %v1811 = vpop.permute.xlu0 %1810
  %1814 = vset.pattern.permute.xlu0 0
  %1815 = vperm.xlu0 %1814, %v1782
  %v1816 = vpop.permute.xlu0 %1815
  %1818 = vmatpush.msra.mxu0 %v1657
  %1819 = vmatpush.msra.mxu0 %v1652
  %1820 = vmatpush.msra.mxu0 %v1650
  %1821 = vmatpush.msra.mxu0 %v1648
  %1822 = vmatpush.msra.mxu0 %v1643
  %1823 = vmatpush.msra.mxu0 %v1641
  %1824 = vmatpush.msra.mxu0 %v1639
  %1825 = vmatpush.msra.mxu0 %v1634
  %1826 = vmatpush.msra.mxu0 %v1632
  %1827 = vmatpush.msra.mxu0 %v1630
  %1828 = vmatpush.msra.mxu0 %v1625
  %1829 = vmatpush.msra.mxu0 %v1623
  %1830 = vmatpush.msra.mxu0 %v1621
  %1831 = vmatpush.msra.mxu0 %v1615
  %1832 = vmatpush.msra.mxu0 %v1612
  %1833 = vmatpush.msra.mxu0 %v1609
  %1834 = vmatmul.f32.gmra.mxu0 %v1755
  %v1835 = vpop.f32.mrf.mxu0
  %v1836 = vadd.f32 %v1786, %v1835
  %1837 = vmatmul.f32.gmra.mxu0 %v1758
  %v1838 = vpop.f32.mrf.mxu0
  %v1839 = vadd.f32 %v1791, %v1838
  %1840 = vmatmul.f32.gmra.mxu0 %v1761
  %v1841 = vpop.f32.mrf.mxu0
  %v1842 = vadd.f32 %v1796, %v1841
  %1843 = vmatmul.f32.gmra.mxu0 %v1764
  %v1844 = vpop.f32.mrf.mxu0
  %v1845 = vadd.f32 %v1801, %v1844
  %1846 = vmatmul.f32.gmra.mxu0 %v1767
  %v1847 = vpop.f32.mrf.mxu0
  %v1848 = vadd.f32 %v1806, %v1847
  %1849 = vmatmul.f32.gmra.mxu0 %v1770
  %v1850 = vpop.f32.mrf.mxu0
  %v1851 = vadd.f32 %v1811, %v1850
  %1852 = vmatmul.f32.gmra.mxu0 %v1773
  %v1853 = vpop.f32.mrf.mxu0
  %v1854 = vadd.f32 %v1816, %v1853
  %1855 = vdwg.mxu0
  %1856 = vmatpush.msra.mxu0 %v1704
  %1857 = vmatpush.msra.mxu0 %v1702
  %1858 = vmatpush.msra.mxu0 %v1697
  %1859 = vmatpush.msra.mxu0 %v1695
  %1860 = vmatpush.msra.mxu0 %v1693
  %1861 = vmatpush.msra.mxu0 %v1688
  %1862 = vmatpush.msra.mxu0 %v1686
  %1863 = vmatpush.msra.mxu0 %v1684
  %1864 = vmatpush.msra.mxu0 %v1679
  %1865 = vmatpush.msra.mxu0 %v1677
  %1866 = vmatpush.msra.mxu0 %v1675
  %1867 = vmatpush.msra.mxu0 %v1670
  %1868 = vmatpush.msra.mxu0 %v1668
  %1869 = vmatpush.msra.mxu0 %v1666
  %1870 = vmatpush.msra.mxu0 %v1661
  %1871 = vmatpush.msra.mxu0 %v1659
  %1872 = vmatmul.f32.gmra.mxu0 %v1756
  %v1873 = vpop.f32.mrf.mxu0
  %v1874 = vadd.f32 %v1836, %v1873
  %1875 = vmatmul.f32.gmra.mxu0 %v1759
  %v1876 = vpop.f32.mrf.mxu0
  %v1877 = vadd.f32 %v1839, %v1876
  %1878 = vmatmul.f32.gmra.mxu0 %v1762
  %v1879 = vpop.f32.mrf.mxu0
  %v1880 = vadd.f32 %v1842, %v1879
  %1881 = vmatmul.f32.gmra.mxu0 %v1765
  %v1882 = vpop.f32.mrf.mxu0
  %v1883 = vadd.f32 %v1845, %v1882
  %1884 = vmatmul.f32.gmra.mxu0 %v1768
  %v1885 = vpop.f32.mrf.mxu0
  %v1886 = vadd.f32 %v1848, %v1885
  %1887 = vmatmul.f32.gmra.mxu0 %v1771
  %v1888 = vpop.f32.mrf.mxu0
  %v1889 = vadd.f32 %v1851, %v1888
  %1890 = vmatmul.f32.gmra.mxu0 %v1774
  %v1891 = vpop.f32.mrf.mxu0
  %v1892 = vadd.f32 %v1854, %v1891
  %1893 = vdwg.mxu0
  %1894 = vmatpush.msra.mxu0 %v1751
  %1895 = vmatpush.msra.mxu0 %v1749
  %1896 = vmatpush.msra.mxu0 %v1747
  %1897 = vmatpush.msra.mxu0 %v1742
  %1898 = vmatpush.msra.mxu0 %v1740
  %1899 = vmatpush.msra.mxu0 %v1738
  %1900 = vmatpush.msra.mxu0 %v1733
  %1901 = vmatpush.msra.mxu0 %v1731
  %1902 = vmatpush.msra.mxu0 %v1729
  %1903 = vmatpush.msra.mxu0 %v1724
  %1904 = vmatpush.msra.mxu0 %v1722
  %1905 = vmatpush.msra.mxu0 %v1720
  %1906 = vmatpush.msra.mxu0 %v1715
  %1907 = vmatpush.msra.mxu0 %v1713
  %1908 = vmatpush.msra.mxu0 %v1711
  %1909 = vmatpush.msra.mxu0 %v1706
  %1910 = vmatmul.f32.gmra.mxu0 %v1757
  %v1911 = vpop.f32.mrf.mxu0
  %v1912 = vadd.f32 %v1874, %v1911
  %1913 = vmatmul.f32.gmra.mxu0 %v1760
  %v1914 = vpop.f32.mrf.mxu0
  %v1915 = vadd.f32 %v1877, %v1914
  %1916 = vmatmul.f32.gmra.mxu0 %v1763
  %v1917 = vpop.f32.mrf.mxu0
  %v1918 = vadd.f32 %v1880, %v1917
  %1919 = vmatmul.f32.gmra.mxu0 %v1766
  %v1920 = vpop.f32.mrf.mxu0
  %v1921 = vadd.f32 %v1883, %v1920
  %1922 = vmatmul.f32.gmra.mxu0 %v1769
  %v1923 = vpop.f32.mrf.mxu0
  %v1924 = vadd.f32 %v1886, %v1923
  %1925 = vmatmul.f32.gmra.mxu0 %v1772
  %v1926 = vpop.f32.mrf.mxu0
  %v1927 = vadd.f32 %v1889, %v1926
  %1928 = vmatmul.f32.gmra.mxu0 %v1775
  %v1929 = vpop.f32.mrf.mxu0
  %v1930 = vadd.f32 %v1892, %v1929
  %1931 = vdwg.mxu0
  %v1932 = vmax.f32 %v1912, 0.0
  %v1933 = vmax.f32 %v1915, 0.0
  %v1934 = vmax.f32 %v1918, 0.0
  %v1935 = vmax.f32 %v1921, 0.0
  %v1936 = vmax.f32 %v1924, 0.0
  %v1937 = vmax.f32 %v1927, 0.0
  %v1938 = vmax.f32 %v1930, 0.0
  %v1939 = vld [vmem:[%s8] sm:$0xff]
  %v1940 = vld [vmem:[%s8 + $0x8] sm:$0x3]
  %v1941 = vld [vmem:[%s9] sm:$0xff]
  %v1942 = vld [vmem:[%s9 + $0x8] sm:$0x3]
  %1944 = vset.pattern.permute.xlu0 0
  %1945 = vperm.xlu0 %1944, %v1941
  %v1946 = vpop.permute.xlu0 %1945
  %1949 = vset.pattern.permute.xlu0 0
  %1950 = vperm.xlu0 %1949, %v1942
  %v1951 = vpop.permute.xlu0 %1950
  %vm1953 = vcmask 408576
  %v1955 = vsel %vm1953, %v1939, 0
  %v1958 = vsel %vm1953, %v1940, 0
  %vm1960 = vcmask 1041408
  %v1962 = vsel %vm1960, %v1938, 0
  %1964 = vmatpush.msra.mxu0 0.0
  %1965 = vmatpush.msra.mxu0 0.0
  %1966 = vmatpush.msra.mxu0 0.0
  %1967 = vmatpush.msra.mxu0 0.0
  %1968 = vmatpush.msra.mxu0 0.0
  %1969 = vmatpush.msra.mxu0 0.0
  %1970 = vmatpush.msra.mxu0 0.0
  %1971 = vmatpush.msra.mxu0 0.0
  %1972 = vmatpush.msra.mxu0 0.0
  %1973 = vmatpush.msra.mxu0 %v1962
  %1974 = vmatpush.msra.mxu0 %v1937
  %1975 = vmatpush.msra.mxu0 %v1936
  %1976 = vmatpush.msra.mxu0 %v1935
  %1977 = vmatpush.msra.mxu0 %v1934
  %1978 = vmatpush.msra.mxu0 %v1933
  %1979 = vmatpush.msra.mxu0 %v1932
  %1980 = vmatmul.f32.gmra.mxu0 %v1955
  %v1981 = vpop.f32.mrf.mxu0
  %v1982 = vadd.f32 %v1946, %v1981
  %1983 = vmatmul.f32.gmra.mxu0 %v1958
  %v1984 = vpop.f32.mrf.mxu0
  %v1985 = vadd.f32 %v1951, %v1984
  %1986 = vdwg.mxu0
  %vm1987 = vcmask 15360
  %v1988 = vsel %vm1987, %v1982, -inf
  %vm1989 = vcmask 9216
  %v1990 = vsel %vm1989, %v1985, -inf
  %v1991 = vmax.f32 %v1988, %v1990
  %v1992 = vrot.slane %v1991, 4
  %v1993 = vmax.f32 %v1991, %v1992
  %v1994 = vrot.slane %v1993, 2
  %v1995 = vmax.f32 %v1993, %v1994
  %v1996 = vrot.slane %v1995, 1
  %v1997 = vmax.f32 %v1995, %v1996
  %v1998 = vsub.f32 %v1982, %v1997
  %v1999 = vsub.f32 %v1985, %v1997
  %v2000 = vmul.f32 %v1998, 1.442695
  %v2001 = vpow.pop %v2000
  %v2002 = vmul.f32 %v1999, 1.442695
  %v2003 = vpow.pop %v2002
  %v2004 = vsel %vm1987, %v2001, 0.0
  %v2005 = vsel %vm1989, %v2003, 0.0
  %v2006 = vadd.f32 %v2004, %v2005
  %v2007 = vrot.slane %v2006, 4
  %v2008 = vadd.f32 %v2006, %v2007
  %v2009 = vrot.slane %v2008, 2
  %v2010 = vadd.f32 %v2008, %v2009
  %v2011 = vrot.slane %v2010, 1
  %v2012 = vadd.f32 %v2010, %v2011
  %v2013 = vlog2.pop %v2012
  %v2014 = vmul.f32 %v2013, 0.6931472
  %v2015 = vsub.f32 %v1998, %v2014
  %v2016 = vsub.f32 %v1999, %v2014
  %2017 = vst.msk [vmem:[%s10] sm:$0xff] %vm1987, %v2015
  %2018 = vst.msk [vmem:[%s10 + $0x8] sm:$0x3] %vm1989, %v2016
  // Predicated region
  $region42: #{net_forward.1} parent=0 // pred_check
    _
  $region43: #{net_forward.1} parent=0 // pred_check_branch
    %2020 = sbr.rel (0) target = $region45
  $region44: #{net_forward.1} parent=0 // pred_region
    _
  $region45: #{net_forward.1} parent=0 // pred_fallthru
    _
  // Predicated region
  $region46: #{net_forward.1} parent=0 // pred_check
    _
  $region47: #{net_forward.1} parent=0 // pred_check_branch
    %2022 = sbr.rel (0) target = $region49
  $region48: #{net_forward.1} parent=0 // pred_region
    _
  $region49: #{net_forward.1} parent=0 // pred_fallthru
    _

</llo_original>
